<compile_context>
chip_gen: v7x
topology: tpu7x:2x2x1
jax: 0.10.0
libtpu: 0.0.40
codegen_flags: <defaults>
</compile_context>

<pallas_src>
import math

import jax
import jax.numpy as jnp
import numpy as np
from jax.experimental import pallas as pl
from jax.experimental.pallas import tpu as pltpu  # noqa: F401 (TPU backend assumed)

EMBED = 32
HEADS = 4
HEAD_DIM = EMBED // HEADS
assert HEAD_DIM * HEADS == EMBED


def self_attention_kernel(q_ref, k_ref, v_ref, bias_ref,
                          wq_ref, bq_ref, wk_ref, bk_ref,
                          wv_ref, bv_ref, wo_ref, bo_ref,
                          out_ref):
    """Single-step kernel: all batches and heads processed in one invocation.

    q/k/v:  (N, L, E) f32
    bias:   (N, Lq, Lk) f32 additive mask bias (0 keep / -1e20 masked)
    wq/wk/wv: (H, E, D) f32 (wq, bq pre-scaled by 1/sqrt(E))
    bq/bk/bv: (H, 1, D) f32
    wo:     (H, D, E) f32,  bo: (1, E) f32
    out:    (N, Lq, E) f32
    """
    N, Lq, E = q_ref.shape
    Lk = k_ref.shape[1]
    Lv = v_ref.shape[1]
    H, _, D = wq_ref.shape
    bf16 = jnp.bfloat16

    # Collapse batch into the sublane axis for the projection matmuls.
    q2 = q_ref[...].reshape(N * Lq, E).astype(bf16)
    k2 = k_ref[...].reshape(N * Lk, E).astype(bf16)
    v2 = v_ref[...].reshape(N * Lv, E).astype(bf16)
    bias = bias_ref[...]                                  # (N, Lq, Lk)

    acc = jnp.zeros((N * Lq, E), jnp.float32)
    for h in range(H):                                    # static unroll over heads
        # Per-head projections: (N*L, E) @ (E, D); bf16 operands, f32 accumulation.
        qh = jnp.dot(q2, wq_ref[h].astype(bf16),
                     preferred_element_type=jnp.float32) + bq_ref[h]
        kh = jnp.dot(k2, wk_ref[h].astype(bf16),
                     preferred_element_type=jnp.float32) + bk_ref[h]
        vh = jnp.dot(v2, wv_ref[h].astype(bf16),
                     preferred_element_type=jnp.float32) + bv_ref[h]

        qh = qh.reshape(N, Lq, D).astype(bf16)
        kh = kh.reshape(N, Lk, D).astype(bf16)
        vh = vh.reshape(N, Lv, D).astype(bf16)

        # energy already carries 1/sqrt(E) (folded into wq/bq); the mask is an
        # additive 0 / -1e20 bias, equivalent to masked_fill-before-scaling.
        energy = jnp.einsum('nqd,nkd->nqk', qh, kh,
                            preferred_element_type=jnp.float32) + bias

        # Numerically stable softmax in f32.
        m = jnp.max(energy, axis=-1, keepdims=True)
        e = jnp.exp(energy - m)
        p = e * pl.reciprocal(jnp.sum(e, axis=-1, keepdims=True), approx=True)

        ctx = jnp.einsum('nqk,nkd->nqd', p.astype(bf16), vh,
                         preferred_element_type=jnp.float32)       # (N, Lq, D)

        # Output projection accumulated per head: concat @ Wo == sum_h ctx_h @ Wo_h.
        acc = acc + jnp.dot(ctx.reshape(N * Lq, D).astype(bf16),
                            wo_ref[h].astype(bf16),
                            preferred_element_type=jnp.float32)

    out_ref[...] = (acc + bo_ref[...]).reshape(N, Lq, E)


def self_attention(values, keys, query, mask, params):
    """Forward pass matching the PyTorch SelfAttention module.

    values/keys/query: (N, L, E) float32
    mask: None or broadcastable to (N, 1, Lq, Lk); entries == 0 are masked out.
    params: torch-layout Linear weights (out, in) and biases (out,).
    """
    N, Lv, E = values.shape
    Lk = keys.shape[1]
    Lq = query.shape[1]
    H, D = HEADS, HEAD_DIM
    assert E == EMBED
    inv_scale = 1.0 / math.sqrt(E)

    def split_w(w):                       # torch (out, in) -> (H, E_in, D)
        return jnp.transpose(w.T.reshape(E, H, D), (1, 0, 2))

    def split_b(b):                       # (E,) -> (H, 1, D)
        return b.reshape(H, 1, D)

    wq = split_w(params["wq"]) * inv_scale        # fold 1/sqrt(E) into Q projection
    bq = split_b(params["bq"]) * inv_scale
    wk = split_w(params["wk"]); bk = split_b(params["bk"])
    wv = split_w(params["wv"]); bv = split_b(params["bv"])
    wo = params["wo"].T.reshape(H, D, E)          # per-head row-blocks of Wo^T
    bo = params["bo"].reshape(1, E)

    # Compact additive mask bias: (N, Lq, Lk), 0 where kept, -1e20 where masked.
    # TODO(synk): head-dependent masks (head dim > 1) are not supported here.
    if mask is None:
        bias = jnp.zeros((N, Lq, Lk), jnp.float32)
    else:
        m4 = jnp.broadcast_to(mask, (N, 1, Lq, Lk))
        bias = jnp.where(m4[:, 0] == 0, jnp.float32(-1e20), jnp.float32(0.0))

    return pl.pallas_call(
        self_attention_kernel,
        out_shape=jax.ShapeDtypeStruct((N, Lq, E), jnp.float32),
    )(query.astype(jnp.float32), keys.astype(jnp.float32),
      values.astype(jnp.float32), bias,
      wq, bq, wk, bk, wv, bv, wo, bo)


def reference_forward(values, keys, query, mask, params):
    """Pure-JAX replica of the PyTorch forward, for verification."""
    N, Lv, E = values.shape
    Lk, Lq = keys.shape[1], query.shape[1]
    H, D = HEADS, HEAD_DIM

    vp = values @ params["wv"].T + params["bv"]
    kp = keys @ params["wk"].T + params["bk"]
    qp = query @ params["wq"].T + params["bq"]

    vp = vp.reshape(N, Lv, H, D)
    kp = kp.reshape(N, Lk, H, D)
    qp = qp.reshape(N, Lq, H, D)

    energy = jnp.einsum("nqhd,nkhd->nhqk", qp, kp)
    energy = jnp.where(mask == 0, jnp.float32(-1e20), energy)
    attn = jax.nn.softmax(energy / math.sqrt(E), axis=3)
    out = jnp.einsum("nhql,nlhd->nqhd", attn, vp).reshape(N, Lq, H * D)
    return out @ params["wo"].T + params["bo"]


def init_params(key, embed):
    """Deterministic torch-Linear-style init: U(-1/sqrt(E), 1/sqrt(E))."""
    bound = 1.0 / math.sqrt(embed)
    names = ["wv", "bv", "wk", "bk", "wq", "bq", "wo", "bo"]
    keys = jax.random.split(key, len(names))
    params = {}
    for name, k in zip(names, keys):
        shape = (embed, embed) if name.startswith("w") else (embed,)
        params[name] = jax.random.uniform(k, shape, jnp.float32, -bound, bound)
    return params


if __name__ == "__main__":
    N, L, E = 2, 8, EMBED

    root = jax.random.PRNGKey(0)
    k_params, k_v, k_k, k_q = jax.random.split(root, 4)

    params = init_params(k_params, E)
    values = jax.random.normal(k_v, (N, L, E), jnp.float32)
    keys_in = jax.random.normal(k_k, (N, L, E), jnp.float32)
    query = jax.random.normal(k_q, (N, L, E), jnp.float32)

    # Causal mask, shape (N, 1, Lq, Lk): 1 = keep, 0 = mask (broadcast over heads).
    causal = (jnp.arange(L)[:, None] >= jnp.arange(L)[None, :]).astype(jnp.float32)
    mask = jnp.broadcast_to(causal, (N, 1, L, L))

    out = jax.block_until_ready(self_attention(values, keys_in, query, mask, params))
    ref = jax.block_until_ready(reference_forward(values, keys_in, query, mask, params))

    np.testing.assert_allclose(np.asarray(out), np.asarray(ref), rtol=2e-2, atol=2e-2)
    print("KERNEL_OK")
</pallas_src>

<mosaic_0001>
module attributes {stable_mosaic.version = 11 : i64} {
  func.func @self_attention_kernel(%arg0: memref<2x8x32xf32, #tpu.memory_space<vmem>>, %arg1: memref<2x8x32xf32, #tpu.memory_space<vmem>>, %arg2: memref<2x8x32xf32, #tpu.memory_space<vmem>>, %arg3: memref<2x8x8xf32, #tpu.memory_space<vmem>>, %arg4: memref<4x32x8xf32, #tpu.memory_space<vmem>>, %arg5: memref<4x1x8xf32, #tpu.memory_space<vmem>>, %arg6: memref<4x32x8xf32, #tpu.memory_space<vmem>>, %arg7: memref<4x1x8xf32, #tpu.memory_space<vmem>>, %arg8: memref<4x32x8xf32, #tpu.memory_space<vmem>>, %arg9: memref<4x1x8xf32, #tpu.memory_space<vmem>>, %arg10: memref<4x8x32xf32, #tpu.memory_space<vmem>>, %arg11: memref<1x32xf32, #tpu.memory_space<vmem>>, %arg12: memref<2x8x32xf32, #tpu.memory_space<vmem>>) attributes {dimension_semantics = [], scalar_prefetch = 0 : i64, scratch_operands = 0 : i64, tpu.core_type = #tpu.core_type<tc>} {
    %c0 = arith.constant 0 : index
    %c0_0 = arith.constant 0 : index
    %c0_1 = arith.constant 0 : index
    %0 = vector.load %arg0[%c0, %c0_0, %c0_1] : memref<2x8x32xf32, #tpu.memory_space<vmem>>, vector<2x8x32xf32>
    %1 = vector.shape_cast %0 : vector<2x8x32xf32> to vector<16x32xf32>
    %2 = arith.truncf %1 : vector<16x32xf32> to vector<16x32xbf16>
    %c0_2 = arith.constant 0 : index
    %c0_3 = arith.constant 0 : index
    %c0_4 = arith.constant 0 : index
    %3 = vector.load %arg1[%c0_2, %c0_3, %c0_4] : memref<2x8x32xf32, #tpu.memory_space<vmem>>, vector<2x8x32xf32>
    %4 = vector.shape_cast %3 : vector<2x8x32xf32> to vector<16x32xf32>
    %5 = arith.truncf %4 : vector<16x32xf32> to vector<16x32xbf16>
    %c0_5 = arith.constant 0 : index
    %c0_6 = arith.constant 0 : index
    %c0_7 = arith.constant 0 : index
    %6 = vector.load %arg2[%c0_5, %c0_6, %c0_7] : memref<2x8x32xf32, #tpu.memory_space<vmem>>, vector<2x8x32xf32>
    %7 = vector.shape_cast %6 : vector<2x8x32xf32> to vector<16x32xf32>
    %8 = arith.truncf %7 : vector<16x32xf32> to vector<16x32xbf16>
    %c0_8 = arith.constant 0 : index
    %c0_9 = arith.constant 0 : index
    %c0_10 = arith.constant 0 : index
    %9 = vector.load %arg3[%c0_8, %c0_9, %c0_10] : memref<2x8x8xf32, #tpu.memory_space<vmem>>, vector<2x8x8xf32>
    %cst = arith.constant 0.000000e+00 : f32
    %10 = vector.broadcast %cst : f32 to vector<16x32xf32>
    %c0_11 = arith.constant 0 : index
    %c0_12 = arith.constant 0 : index
    %c0_13 = arith.constant 0 : index
    %11 = vector.load %arg4[%c0_11, %c0_12, %c0_13] : memref<4x32x8xf32, #tpu.memory_space<vmem>>, vector<1x32x8xf32>
    %12 = vector.shape_cast %11 : vector<1x32x8xf32> to vector<32x8xf32>
    %13 = arith.truncf %12 : vector<32x8xf32> to vector<32x8xbf16>
    %cst_14 = arith.constant dense<0.000000e+00> : vector<16x8xf32>
    %14 = tpu.matmul %2, %13, %cst_14 {dimension_numbers = #tpu.dot_dimension_numbers<[1], [0], [0], [1], [0, 0, 1, 1], [], []>} : vector<16x32xbf16>, vector<32x8xbf16>, vector<16x8xf32> -> vector<16x8xf32>
    %c0_15 = arith.constant 0 : index
    %c0_16 = arith.constant 0 : index
    %c0_17 = arith.constant 0 : index
    %15 = vector.load %arg5[%c0_15, %c0_16, %c0_17] : memref<4x1x8xf32, #tpu.memory_space<vmem>>, vector<1x1x8xf32>
    %16 = vector.shape_cast %15 : vector<1x1x8xf32> to vector<1x8xf32>
    %17 = vector.broadcast %16 : vector<1x8xf32> to vector<16x8xf32>
    %18 = arith.addf %14, %17 : vector<16x8xf32>
    %c0_18 = arith.constant 0 : index
    %c0_19 = arith.constant 0 : index
    %c0_20 = arith.constant 0 : index
    %19 = vector.load %arg6[%c0_18, %c0_19, %c0_20] : memref<4x32x8xf32, #tpu.memory_space<vmem>>, vector<1x32x8xf32>
    %20 = vector.shape_cast %19 : vector<1x32x8xf32> to vector<32x8xf32>
    %21 = arith.truncf %20 : vector<32x8xf32> to vector<32x8xbf16>
    %cst_21 = arith.constant dense<0.000000e+00> : vector<16x8xf32>
    %22 = tpu.matmul %5, %21, %cst_21 {dimension_numbers = #tpu.dot_dimension_numbers<[1], [0], [0], [1], [0, 0, 1, 1], [], []>} : vector<16x32xbf16>, vector<32x8xbf16>, vector<16x8xf32> -> vector<16x8xf32>
    %c0_22 = arith.constant 0 : index
    %c0_23 = arith.constant 0 : index
    %c0_24 = arith.constant 0 : index
    %23 = vector.load %arg7[%c0_22, %c0_23, %c0_24] : memref<4x1x8xf32, #tpu.memory_space<vmem>>, vector<1x1x8xf32>
    %24 = vector.shape_cast %23 : vector<1x1x8xf32> to vector<1x8xf32>
    %25 = vector.broadcast %24 : vector<1x8xf32> to vector<16x8xf32>
    %26 = arith.addf %22, %25 : vector<16x8xf32>
    %c0_25 = arith.constant 0 : index
    %c0_26 = arith.constant 0 : index
    %c0_27 = arith.constant 0 : index
    %27 = vector.load %arg8[%c0_25, %c0_26, %c0_27] : memref<4x32x8xf32, #tpu.memory_space<vmem>>, vector<1x32x8xf32>
    %28 = vector.shape_cast %27 : vector<1x32x8xf32> to vector<32x8xf32>
    %29 = arith.truncf %28 : vector<32x8xf32> to vector<32x8xbf16>
    %cst_28 = arith.constant dense<0.000000e+00> : vector<16x8xf32>
    %30 = tpu.matmul %8, %29, %cst_28 {dimension_numbers = #tpu.dot_dimension_numbers<[1], [0], [0], [1], [0, 0, 1, 1], [], []>} : vector<16x32xbf16>, vector<32x8xbf16>, vector<16x8xf32> -> vector<16x8xf32>
    %c0_29 = arith.constant 0 : index
    %c0_30 = arith.constant 0 : index
    %c0_31 = arith.constant 0 : index
    %31 = vector.load %arg9[%c0_29, %c0_30, %c0_31] : memref<4x1x8xf32, #tpu.memory_space<vmem>>, vector<1x1x8xf32>
    %32 = vector.shape_cast %31 : vector<1x1x8xf32> to vector<1x8xf32>
    %33 = vector.broadcast %32 : vector<1x8xf32> to vector<16x8xf32>
    %34 = arith.addf %30, %33 : vector<16x8xf32>
    %35 = vector.shape_cast %18 : vector<16x8xf32> to vector<2x8x8xf32>
    %36 = arith.truncf %35 : vector<2x8x8xf32> to vector<2x8x8xbf16>
    %37 = vector.shape_cast %26 : vector<16x8xf32> to vector<2x8x8xf32>
    %38 = arith.truncf %37 : vector<2x8x8xf32> to vector<2x8x8xbf16>
    %39 = vector.shape_cast %34 : vector<16x8xf32> to vector<2x8x8xf32>
    %40 = arith.truncf %39 : vector<2x8x8xf32> to vector<2x8x8xbf16>
    "tpu.trace_start"() <{level = 10 : i32, message = "nqd,nkd->nqk"}> : () -> ()
    %cst_32 = arith.constant dense<0.000000e+00> : vector<2x8x8xf32>
    %41 = tpu.matmul %36, %38, %cst_32 {dimension_numbers = #tpu.dot_dimension_numbers<[2], [2], [1], [1], [0, 0, 0, 1, 1, 1], [0], [0]>} : vector<2x8x8xbf16>, vector<2x8x8xbf16>, vector<2x8x8xf32> -> vector<2x8x8xf32>
    "tpu.trace_stop"() : () -> ()
    %42 = arith.addf %41, %9 : vector<2x8x8xf32>
    %cst_33 = arith.constant dense<0xFF800000> : vector<2x8xf32>
    %43 = vector.multi_reduction <maximumf>, %42, %cst_33 [2] : vector<2x8x8xf32> to vector<2x8xf32>
    %44 = vector.shape_cast %43 : vector<2x8xf32> to vector<2x8x1xf32>
    %45 = vector.broadcast %44 : vector<2x8x1xf32> to vector<2x8x8xf32>
    %46 = arith.subf %42, %45 : vector<2x8x8xf32>
    %47 = math.exp %46 : vector<2x8x8xf32>
    %cst_34 = arith.constant dense<0.000000e+00> : vector<2x8xf32>
    %48 = vector.multi_reduction <add>, %47, %cst_34 [2] : vector<2x8x8xf32> to vector<2x8xf32>
    %49 = vector.shape_cast %48 : vector<2x8xf32> to vector<2x8x1xf32>
    %50 = tpu.reciprocal %49 {approx = true} : vector<2x8x1xf32> -> vector<2x8x1xf32>
    %51 = vector.broadcast %50 : vector<2x8x1xf32> to vector<2x8x8xf32>
    %52 = arith.mulf %47, %51 : vector<2x8x8xf32>
    %53 = arith.truncf %52 : vector<2x8x8xf32> to vector<2x8x8xbf16>
    "tpu.trace_start"() <{level = 10 : i32, message = "nqk,nkd->nqd"}> : () -> ()
    %cst_35 = arith.constant dense<0.000000e+00> : vector<2x8x8xf32>
    %54 = tpu.matmul %53, %40, %cst_35 {dimension_numbers = #tpu.dot_dimension_numbers<[2], [1], [1], [2], [0, 0, 0, 1, 1, 2], [0], [0]>} : vector<2x8x8xbf16>, vector<2x8x8xbf16>, vector<2x8x8xf32> -> vector<2x8x8xf32>
    "tpu.trace_stop"() : () -> ()
    %55 = vector.shape_cast %54 : vector<2x8x8xf32> to vector<16x8xf32>
    %56 = arith.truncf %55 : vector<16x8xf32> to vector<16x8xbf16>
    %c0_36 = arith.constant 0 : index
    %c0_37 = arith.constant 0 : index
    %c0_38 = arith.constant 0 : index
    %57 = vector.load %arg10[%c0_36, %c0_37, %c0_38] : memref<4x8x32xf32, #tpu.memory_space<vmem>>, vector<1x8x32xf32>
    %58 = vector.shape_cast %57 : vector<1x8x32xf32> to vector<8x32xf32>
    %59 = arith.truncf %58 : vector<8x32xf32> to vector<8x32xbf16>
    %cst_39 = arith.constant dense<0.000000e+00> : vector<16x32xf32>
    %60 = tpu.matmul %56, %59, %cst_39 {dimension_numbers = #tpu.dot_dimension_numbers<[1], [0], [0], [1], [0, 0, 1, 1], [], []>} : vector<16x8xbf16>, vector<8x32xbf16>, vector<16x32xf32> -> vector<16x32xf32>
    %61 = arith.addf %10, %60 : vector<16x32xf32>
    %c1 = arith.constant 1 : index
    %c0_40 = arith.constant 0 : index
    %c0_41 = arith.constant 0 : index
    %62 = vector.load %arg4[%c1, %c0_40, %c0_41] : memref<4x32x8xf32, #tpu.memory_space<vmem>>, vector<1x32x8xf32>
    %63 = vector.shape_cast %62 : vector<1x32x8xf32> to vector<32x8xf32>
    %64 = arith.truncf %63 : vector<32x8xf32> to vector<32x8xbf16>
    %cst_42 = arith.constant dense<0.000000e+00> : vector<16x8xf32>
    %65 = tpu.matmul %2, %64, %cst_42 {dimension_numbers = #tpu.dot_dimension_numbers<[1], [0], [0], [1], [0, 0, 1, 1], [], []>} : vector<16x32xbf16>, vector<32x8xbf16>, vector<16x8xf32> -> vector<16x8xf32>
    %c1_43 = arith.constant 1 : index
    %c0_44 = arith.constant 0 : index
    %c0_45 = arith.constant 0 : index
    %66 = vector.load %arg5[%c1_43, %c0_44, %c0_45] : memref<4x1x8xf32, #tpu.memory_space<vmem>>, vector<1x1x8xf32>
    %67 = vector.shape_cast %66 : vector<1x1x8xf32> to vector<1x8xf32>
    %68 = vector.broadcast %67 : vector<1x8xf32> to vector<16x8xf32>
    %69 = arith.addf %65, %68 : vector<16x8xf32>
    %c1_46 = arith.constant 1 : index
    %c0_47 = arith.constant 0 : index
    %c0_48 = arith.constant 0 : index
    %70 = vector.load %arg6[%c1_46, %c0_47, %c0_48] : memref<4x32x8xf32, #tpu.memory_space<vmem>>, vector<1x32x8xf32>
    %71 = vector.shape_cast %70 : vector<1x32x8xf32> to vector<32x8xf32>
    %72 = arith.truncf %71 : vector<32x8xf32> to vector<32x8xbf16>
    %cst_49 = arith.constant dense<0.000000e+00> : vector<16x8xf32>
    %73 = tpu.matmul %5, %72, %cst_49 {dimension_numbers = #tpu.dot_dimension_numbers<[1], [0], [0], [1], [0, 0, 1, 1], [], []>} : vector<16x32xbf16>, vector<32x8xbf16>, vector<16x8xf32> -> vector<16x8xf32>
    %c1_50 = arith.constant 1 : index
    %c0_51 = arith.constant 0 : index
    %c0_52 = arith.constant 0 : index
    %74 = vector.load %arg7[%c1_50, %c0_51, %c0_52] : memref<4x1x8xf32, #tpu.memory_space<vmem>>, vector<1x1x8xf32>
    %75 = vector.shape_cast %74 : vector<1x1x8xf32> to vector<1x8xf32>
    %76 = vector.broadcast %75 : vector<1x8xf32> to vector<16x8xf32>
    %77 = arith.addf %73, %76 : vector<16x8xf32>
    %c1_53 = arith.constant 1 : index
    %c0_54 = arith.constant 0 : index
    %c0_55 = arith.constant 0 : index
    %78 = vector.load %arg8[%c1_53, %c0_54, %c0_55] : memref<4x32x8xf32, #tpu.memory_space<vmem>>, vector<1x32x8xf32>
    %79 = vector.shape_cast %78 : vector<1x32x8xf32> to vector<32x8xf32>
    %80 = arith.truncf %79 : vector<32x8xf32> to vector<32x8xbf16>
    %cst_56 = arith.constant dense<0.000000e+00> : vector<16x8xf32>
    %81 = tpu.matmul %8, %80, %cst_56 {dimension_numbers = #tpu.dot_dimension_numbers<[1], [0], [0], [1], [0, 0, 1, 1], [], []>} : vector<16x32xbf16>, vector<32x8xbf16>, vector<16x8xf32> -> vector<16x8xf32>
    %c1_57 = arith.constant 1 : index
    %c0_58 = arith.constant 0 : index
    %c0_59 = arith.constant 0 : index
    %82 = vector.load %arg9[%c1_57, %c0_58, %c0_59] : memref<4x1x8xf32, #tpu.memory_space<vmem>>, vector<1x1x8xf32>
    %83 = vector.shape_cast %82 : vector<1x1x8xf32> to vector<1x8xf32>
    %84 = vector.broadcast %83 : vector<1x8xf32> to vector<16x8xf32>
    %85 = arith.addf %81, %84 : vector<16x8xf32>
    %86 = vector.shape_cast %69 : vector<16x8xf32> to vector<2x8x8xf32>
    %87 = arith.truncf %86 : vector<2x8x8xf32> to vector<2x8x8xbf16>
    %88 = vector.shape_cast %77 : vector<16x8xf32> to vector<2x8x8xf32>
    %89 = arith.truncf %88 : vector<2x8x8xf32> to vector<2x8x8xbf16>
    %90 = vector.shape_cast %85 : vector<16x8xf32> to vector<2x8x8xf32>
    %91 = arith.truncf %90 : vector<2x8x8xf32> to vector<2x8x8xbf16>
    "tpu.trace_start"() <{level = 10 : i32, message = "nqd,nkd->nqk"}> : () -> ()
    %cst_60 = arith.constant dense<0.000000e+00> : vector<2x8x8xf32>
    %92 = tpu.matmul %87, %89, %cst_60 {dimension_numbers = #tpu.dot_dimension_numbers<[2], [2], [1], [1], [0, 0, 0, 1, 1, 1], [0], [0]>} : vector<2x8x8xbf16>, vector<2x8x8xbf16>, vector<2x8x8xf32> -> vector<2x8x8xf32>
    "tpu.trace_stop"() : () -> ()
    %93 = arith.addf %92, %9 : vector<2x8x8xf32>
    %cst_61 = arith.constant dense<0xFF800000> : vector<2x8xf32>
    %94 = vector.multi_reduction <maximumf>, %93, %cst_61 [2] : vector<2x8x8xf32> to vector<2x8xf32>
    %95 = vector.shape_cast %94 : vector<2x8xf32> to vector<2x8x1xf32>
    %96 = vector.broadcast %95 : vector<2x8x1xf32> to vector<2x8x8xf32>
    %97 = arith.subf %93, %96 : vector<2x8x8xf32>
    %98 = math.exp %97 : vector<2x8x8xf32>
    %cst_62 = arith.constant dense<0.000000e+00> : vector<2x8xf32>
    %99 = vector.multi_reduction <add>, %98, %cst_62 [2] : vector<2x8x8xf32> to vector<2x8xf32>
    %100 = vector.shape_cast %99 : vector<2x8xf32> to vector<2x8x1xf32>
    %101 = tpu.reciprocal %100 {approx = true} : vector<2x8x1xf32> -> vector<2x8x1xf32>
    %102 = vector.broadcast %101 : vector<2x8x1xf32> to vector<2x8x8xf32>
    %103 = arith.mulf %98, %102 : vector<2x8x8xf32>
    %104 = arith.truncf %103 : vector<2x8x8xf32> to vector<2x8x8xbf16>
    "tpu.trace_start"() <{level = 10 : i32, message = "nqk,nkd->nqd"}> : () -> ()
    %cst_63 = arith.constant dense<0.000000e+00> : vector<2x8x8xf32>
    %105 = tpu.matmul %104, %91, %cst_63 {dimension_numbers = #tpu.dot_dimension_numbers<[2], [1], [1], [2], [0, 0, 0, 1, 1, 2], [0], [0]>} : vector<2x8x8xbf16>, vector<2x8x8xbf16>, vector<2x8x8xf32> -> vector<2x8x8xf32>
    "tpu.trace_stop"() : () -> ()
    %106 = vector.shape_cast %105 : vector<2x8x8xf32> to vector<16x8xf32>
    %107 = arith.truncf %106 : vector<16x8xf32> to vector<16x8xbf16>
    %c1_64 = arith.constant 1 : index
    %c0_65 = arith.constant 0 : index
    %c0_66 = arith.constant 0 : index
    %108 = vector.load %arg10[%c1_64, %c0_65, %c0_66] : memref<4x8x32xf32, #tpu.memory_space<vmem>>, vector<1x8x32xf32>
    %109 = vector.shape_cast %108 : vector<1x8x32xf32> to vector<8x32xf32>
    %110 = arith.truncf %109 : vector<8x32xf32> to vector<8x32xbf16>
    %cst_67 = arith.constant dense<0.000000e+00> : vector<16x32xf32>
    %111 = tpu.matmul %107, %110, %cst_67 {dimension_numbers = #tpu.dot_dimension_numbers<[1], [0], [0], [1], [0, 0, 1, 1], [], []>} : vector<16x8xbf16>, vector<8x32xbf16>, vector<16x32xf32> -> vector<16x32xf32>
    %112 = arith.addf %61, %111 : vector<16x32xf32>
    %c2 = arith.constant 2 : index
    %c0_68 = arith.constant 0 : index
    %c0_69 = arith.constant 0 : index
    %113 = vector.load %arg4[%c2, %c0_68, %c0_69] : memref<4x32x8xf32, #tpu.memory_space<vmem>>, vector<1x32x8xf32>
    %114 = vector.shape_cast %113 : vector<1x32x8xf32> to vector<32x8xf32>
    %115 = arith.truncf %114 : vector<32x8xf32> to vector<32x8xbf16>
    %cst_70 = arith.constant dense<0.000000e+00> : vector<16x8xf32>
    %116 = tpu.matmul %2, %115, %cst_70 {dimension_numbers = #tpu.dot_dimension_numbers<[1], [0], [0], [1], [0, 0, 1, 1], [], []>} : vector<16x32xbf16>, vector<32x8xbf16>, vector<16x8xf32> -> vector<16x8xf32>
    %c2_71 = arith.constant 2 : index
    %c0_72 = arith.constant 0 : index
    %c0_73 = arith.constant 0 : index
    %117 = vector.load %arg5[%c2_71, %c0_72, %c0_73] : memref<4x1x8xf32, #tpu.memory_space<vmem>>, vector<1x1x8xf32>
    %118 = vector.shape_cast %117 : vector<1x1x8xf32> to vector<1x8xf32>
    %119 = vector.broadcast %118 : vector<1x8xf32> to vector<16x8xf32>
    %120 = arith.addf %116, %119 : vector<16x8xf32>
    %c2_74 = arith.constant 2 : index
    %c0_75 = arith.constant 0 : index
    %c0_76 = arith.constant 0 : index
    %121 = vector.load %arg6[%c2_74, %c0_75, %c0_76] : memref<4x32x8xf32, #tpu.memory_space<vmem>>, vector<1x32x8xf32>
    %122 = vector.shape_cast %121 : vector<1x32x8xf32> to vector<32x8xf32>
    %123 = arith.truncf %122 : vector<32x8xf32> to vector<32x8xbf16>
    %cst_77 = arith.constant dense<0.000000e+00> : vector<16x8xf32>
    %124 = tpu.matmul %5, %123, %cst_77 {dimension_numbers = #tpu.dot_dimension_numbers<[1], [0], [0], [1], [0, 0, 1, 1], [], []>} : vector<16x32xbf16>, vector<32x8xbf16>, vector<16x8xf32> -> vector<16x8xf32>
    %c2_78 = arith.constant 2 : index
    %c0_79 = arith.constant 0 : index
    %c0_80 = arith.constant 0 : index
    %125 = vector.load %arg7[%c2_78, %c0_79, %c0_80] : memref<4x1x8xf32, #tpu.memory_space<vmem>>, vector<1x1x8xf32>
    %126 = vector.shape_cast %125 : vector<1x1x8xf32> to vector<1x8xf32>
    %127 = vector.broadcast %126 : vector<1x8xf32> to vector<16x8xf32>
    %128 = arith.addf %124, %127 : vector<16x8xf32>
    %c2_81 = arith.constant 2 : index
    %c0_82 = arith.constant 0 : index
    %c0_83 = arith.constant 0 : index
    %129 = vector.load %arg8[%c2_81, %c0_82, %c0_83] : memref<4x32x8xf32, #tpu.memory_space<vmem>>, vector<1x32x8xf32>
    %130 = vector.shape_cast %129 : vector<1x32x8xf32> to vector<32x8xf32>
    %131 = arith.truncf %130 : vector<32x8xf32> to vector<32x8xbf16>
    %cst_84 = arith.constant dense<0.000000e+00> : vector<16x8xf32>
    %132 = tpu.matmul %8, %131, %cst_84 {dimension_numbers = #tpu.dot_dimension_numbers<[1], [0], [0], [1], [0, 0, 1, 1], [], []>} : vector<16x32xbf16>, vector<32x8xbf16>, vector<16x8xf32> -> vector<16x8xf32>
    %c2_85 = arith.constant 2 : index
    %c0_86 = arith.constant 0 : index
    %c0_87 = arith.constant 0 : index
    %133 = vector.load %arg9[%c2_85, %c0_86, %c0_87] : memref<4x1x8xf32, #tpu.memory_space<vmem>>, vector<1x1x8xf32>
    %134 = vector.shape_cast %133 : vector<1x1x8xf32> to vector<1x8xf32>
    %135 = vector.broadcast %134 : vector<1x8xf32> to vector<16x8xf32>
    %136 = arith.addf %132, %135 : vector<16x8xf32>
    %137 = vector.shape_cast %120 : vector<16x8xf32> to vector<2x8x8xf32>
    %138 = arith.truncf %137 : vector<2x8x8xf32> to vector<2x8x8xbf16>
    %139 = vector.shape_cast %128 : vector<16x8xf32> to vector<2x8x8xf32>
    %140 = arith.truncf %139 : vector<2x8x8xf32> to vector<2x8x8xbf16>
    %141 = vector.shape_cast %136 : vector<16x8xf32> to vector<2x8x8xf32>
    %142 = arith.truncf %141 : vector<2x8x8xf32> to vector<2x8x8xbf16>
    "tpu.trace_start"() <{level = 10 : i32, message = "nqd,nkd->nqk"}> : () -> ()
    %cst_88 = arith.constant dense<0.000000e+00> : vector<2x8x8xf32>
    %143 = tpu.matmul %138, %140, %cst_88 {dimension_numbers = #tpu.dot_dimension_numbers<[2], [2], [1], [1], [0, 0, 0, 1, 1, 1], [0], [0]>} : vector<2x8x8xbf16>, vector<2x8x8xbf16>, vector<2x8x8xf32> -> vector<2x8x8xf32>
    "tpu.trace_stop"() : () -> ()
    %144 = arith.addf %143, %9 : vector<2x8x8xf32>
    %cst_89 = arith.constant dense<0xFF800000> : vector<2x8xf32>
    %145 = vector.multi_reduction <maximumf>, %144, %cst_89 [2] : vector<2x8x8xf32> to vector<2x8xf32>
    %146 = vector.shape_cast %145 : vector<2x8xf32> to vector<2x8x1xf32>
    %147 = vector.broadcast %146 : vector<2x8x1xf32> to vector<2x8x8xf32>
    %148 = arith.subf %144, %147 : vector<2x8x8xf32>
    %149 = math.exp %148 : vector<2x8x8xf32>
    %cst_90 = arith.constant dense<0.000000e+00> : vector<2x8xf32>
    %150 = vector.multi_reduction <add>, %149, %cst_90 [2] : vector<2x8x8xf32> to vector<2x8xf32>
    %151 = vector.shape_cast %150 : vector<2x8xf32> to vector<2x8x1xf32>
    %152 = tpu.reciprocal %151 {approx = true} : vector<2x8x1xf32> -> vector<2x8x1xf32>
    %153 = vector.broadcast %152 : vector<2x8x1xf32> to vector<2x8x8xf32>
    %154 = arith.mulf %149, %153 : vector<2x8x8xf32>
    %155 = arith.truncf %154 : vector<2x8x8xf32> to vector<2x8x8xbf16>
    "tpu.trace_start"() <{level = 10 : i32, message = "nqk,nkd->nqd"}> : () -> ()
    %cst_91 = arith.constant dense<0.000000e+00> : vector<2x8x8xf32>
    %156 = tpu.matmul %155, %142, %cst_91 {dimension_numbers = #tpu.dot_dimension_numbers<[2], [1], [1], [2], [0, 0, 0, 1, 1, 2], [0], [0]>} : vector<2x8x8xbf16>, vector<2x8x8xbf16>, vector<2x8x8xf32> -> vector<2x8x8xf32>
    "tpu.trace_stop"() : () -> ()
    %157 = vector.shape_cast %156 : vector<2x8x8xf32> to vector<16x8xf32>
    %158 = arith.truncf %157 : vector<16x8xf32> to vector<16x8xbf16>
    %c2_92 = arith.constant 2 : index
    %c0_93 = arith.constant 0 : index
    %c0_94 = arith.constant 0 : index
    %159 = vector.load %arg10[%c2_92, %c0_93, %c0_94] : memref<4x8x32xf32, #tpu.memory_space<vmem>>, vector<1x8x32xf32>
    %160 = vector.shape_cast %159 : vector<1x8x32xf32> to vector<8x32xf32>
    %161 = arith.truncf %160 : vector<8x32xf32> to vector<8x32xbf16>
    %cst_95 = arith.constant dense<0.000000e+00> : vector<16x32xf32>
    %162 = tpu.matmul %158, %161, %cst_95 {dimension_numbers = #tpu.dot_dimension_numbers<[1], [0], [0], [1], [0, 0, 1, 1], [], []>} : vector<16x8xbf16>, vector<8x32xbf16>, vector<16x32xf32> -> vector<16x32xf32>
    %163 = arith.addf %112, %162 : vector<16x32xf32>
    %c3 = arith.constant 3 : index
    %c0_96 = arith.constant 0 : index
    %c0_97 = arith.constant 0 : index
    %164 = vector.load %arg4[%c3, %c0_96, %c0_97] : memref<4x32x8xf32, #tpu.memory_space<vmem>>, vector<1x32x8xf32>
    %165 = vector.shape_cast %164 : vector<1x32x8xf32> to vector<32x8xf32>
    %166 = arith.truncf %165 : vector<32x8xf32> to vector<32x8xbf16>
    %cst_98 = arith.constant dense<0.000000e+00> : vector<16x8xf32>
    %167 = tpu.matmul %2, %166, %cst_98 {dimension_numbers = #tpu.dot_dimension_numbers<[1], [0], [0], [1], [0, 0, 1, 1], [], []>} : vector<16x32xbf16>, vector<32x8xbf16>, vector<16x8xf32> -> vector<16x8xf32>
    %c3_99 = arith.constant 3 : index
    %c0_100 = arith.constant 0 : index
    %c0_101 = arith.constant 0 : index
    %168 = vector.load %arg5[%c3_99, %c0_100, %c0_101] : memref<4x1x8xf32, #tpu.memory_space<vmem>>, vector<1x1x8xf32>
    %169 = vector.shape_cast %168 : vector<1x1x8xf32> to vector<1x8xf32>
    %170 = vector.broadcast %169 : vector<1x8xf32> to vector<16x8xf32>
    %171 = arith.addf %167, %170 : vector<16x8xf32>
    %c3_102 = arith.constant 3 : index
    %c0_103 = arith.constant 0 : index
    %c0_104 = arith.constant 0 : index
    %172 = vector.load %arg6[%c3_102, %c0_103, %c0_104] : memref<4x32x8xf32, #tpu.memory_space<vmem>>, vector<1x32x8xf32>
    %173 = vector.shape_cast %172 : vector<1x32x8xf32> to vector<32x8xf32>
    %174 = arith.truncf %173 : vector<32x8xf32> to vector<32x8xbf16>
    %cst_105 = arith.constant dense<0.000000e+00> : vector<16x8xf32>
    %175 = tpu.matmul %5, %174, %cst_105 {dimension_numbers = #tpu.dot_dimension_numbers<[1], [0], [0], [1], [0, 0, 1, 1], [], []>} : vector<16x32xbf16>, vector<32x8xbf16>, vector<16x8xf32> -> vector<16x8xf32>
    %c3_106 = arith.constant 3 : index
    %c0_107 = arith.constant 0 : index
    %c0_108 = arith.constant 0 : index
    %176 = vector.load %arg7[%c3_106, %c0_107, %c0_108] : memref<4x1x8xf32, #tpu.memory_space<vmem>>, vector<1x1x8xf32>
    %177 = vector.shape_cast %176 : vector<1x1x8xf32> to vector<1x8xf32>
    %178 = vector.broadcast %177 : vector<1x8xf32> to vector<16x8xf32>
    %179 = arith.addf %175, %178 : vector<16x8xf32>
    %c3_109 = arith.constant 3 : index
    %c0_110 = arith.constant 0 : index
    %c0_111 = arith.constant 0 : index
    %180 = vector.load %arg8[%c3_109, %c0_110, %c0_111] : memref<4x32x8xf32, #tpu.memory_space<vmem>>, vector<1x32x8xf32>
    %181 = vector.shape_cast %180 : vector<1x32x8xf32> to vector<32x8xf32>
    %182 = arith.truncf %181 : vector<32x8xf32> to vector<32x8xbf16>
    %cst_112 = arith.constant dense<0.000000e+00> : vector<16x8xf32>
    %183 = tpu.matmul %8, %182, %cst_112 {dimension_numbers = #tpu.dot_dimension_numbers<[1], [0], [0], [1], [0, 0, 1, 1], [], []>} : vector<16x32xbf16>, vector<32x8xbf16>, vector<16x8xf32> -> vector<16x8xf32>
    %c3_113 = arith.constant 3 : index
    %c0_114 = arith.constant 0 : index
    %c0_115 = arith.constant 0 : index
    %184 = vector.load %arg9[%c3_113, %c0_114, %c0_115] : memref<4x1x8xf32, #tpu.memory_space<vmem>>, vector<1x1x8xf32>
    %185 = vector.shape_cast %184 : vector<1x1x8xf32> to vector<1x8xf32>
    %186 = vector.broadcast %185 : vector<1x8xf32> to vector<16x8xf32>
    %187 = arith.addf %183, %186 : vector<16x8xf32>
    %188 = vector.shape_cast %171 : vector<16x8xf32> to vector<2x8x8xf32>
    %189 = arith.truncf %188 : vector<2x8x8xf32> to vector<2x8x8xbf16>
    %190 = vector.shape_cast %179 : vector<16x8xf32> to vector<2x8x8xf32>
    %191 = arith.truncf %190 : vector<2x8x8xf32> to vector<2x8x8xbf16>
    %192 = vector.shape_cast %187 : vector<16x8xf32> to vector<2x8x8xf32>
    %193 = arith.truncf %192 : vector<2x8x8xf32> to vector<2x8x8xbf16>
    "tpu.trace_start"() <{level = 10 : i32, message = "nqd,nkd->nqk"}> : () -> ()
    %cst_116 = arith.constant dense<0.000000e+00> : vector<2x8x8xf32>
    %194 = tpu.matmul %189, %191, %cst_116 {dimension_numbers = #tpu.dot_dimension_numbers<[2], [2], [1], [1], [0, 0, 0, 1, 1, 1], [0], [0]>} : vector<2x8x8xbf16>, vector<2x8x8xbf16>, vector<2x8x8xf32> -> vector<2x8x8xf32>
    "tpu.trace_stop"() : () -> ()
    %195 = arith.addf %194, %9 : vector<2x8x8xf32>
    %cst_117 = arith.constant dense<0xFF800000> : vector<2x8xf32>
    %196 = vector.multi_reduction <maximumf>, %195, %cst_117 [2] : vector<2x8x8xf32> to vector<2x8xf32>
    %197 = vector.shape_cast %196 : vector<2x8xf32> to vector<2x8x1xf32>
    %198 = vector.broadcast %197 : vector<2x8x1xf32> to vector<2x8x8xf32>
    %199 = arith.subf %195, %198 : vector<2x8x8xf32>
    %200 = math.exp %199 : vector<2x8x8xf32>
    %cst_118 = arith.constant dense<0.000000e+00> : vector<2x8xf32>
    %201 = vector.multi_reduction <add>, %200, %cst_118 [2] : vector<2x8x8xf32> to vector<2x8xf32>
    %202 = vector.shape_cast %201 : vector<2x8xf32> to vector<2x8x1xf32>
    %203 = tpu.reciprocal %202 {approx = true} : vector<2x8x1xf32> -> vector<2x8x1xf32>
    %204 = vector.broadcast %203 : vector<2x8x1xf32> to vector<2x8x8xf32>
    %205 = arith.mulf %200, %204 : vector<2x8x8xf32>
    %206 = arith.truncf %205 : vector<2x8x8xf32> to vector<2x8x8xbf16>
    "tpu.trace_start"() <{level = 10 : i32, message = "nqk,nkd->nqd"}> : () -> ()
    %cst_119 = arith.constant dense<0.000000e+00> : vector<2x8x8xf32>
    %207 = tpu.matmul %206, %193, %cst_119 {dimension_numbers = #tpu.dot_dimension_numbers<[2], [1], [1], [2], [0, 0, 0, 1, 1, 2], [0], [0]>} : vector<2x8x8xbf16>, vector<2x8x8xbf16>, vector<2x8x8xf32> -> vector<2x8x8xf32>
    "tpu.trace_stop"() : () -> ()
    %208 = vector.shape_cast %207 : vector<2x8x8xf32> to vector<16x8xf32>
    %209 = arith.truncf %208 : vector<16x8xf32> to vector<16x8xbf16>
    %c3_120 = arith.constant 3 : index
    %c0_121 = arith.constant 0 : index
    %c0_122 = arith.constant 0 : index
    %210 = vector.load %arg10[%c3_120, %c0_121, %c0_122] : memref<4x8x32xf32, #tpu.memory_space<vmem>>, vector<1x8x32xf32>
    %211 = vector.shape_cast %210 : vector<1x8x32xf32> to vector<8x32xf32>
    %212 = arith.truncf %211 : vector<8x32xf32> to vector<8x32xbf16>
    %cst_123 = arith.constant dense<0.000000e+00> : vector<16x32xf32>
    %213 = tpu.matmul %209, %212, %cst_123 {dimension_numbers = #tpu.dot_dimension_numbers<[1], [0], [0], [1], [0, 0, 1, 1], [], []>} : vector<16x8xbf16>, vector<8x32xbf16>, vector<16x32xf32> -> vector<16x32xf32>
    %214 = arith.addf %163, %213 : vector<16x32xf32>
    %c0_124 = arith.constant 0 : index
    %c0_125 = arith.constant 0 : index
    %215 = vector.load %arg11[%c0_124, %c0_125] : memref<1x32xf32, #tpu.memory_space<vmem>>, vector<1x32xf32>
    %216 = vector.broadcast %215 : vector<1x32xf32> to vector<16x32xf32>
    %217 = arith.addf %214, %216 : vector<16x32xf32>
    %218 = vector.shape_cast %217 : vector<16x32xf32> to vector<2x8x32xf32>
    %c0_126 = arith.constant 0 : index
    %c0_127 = arith.constant 0 : index
    %c0_128 = arith.constant 0 : index
    %219 = vector.load %arg12[%c0_126, %c0_127, %c0_128] : memref<2x8x32xf32, #tpu.memory_space<vmem>>, vector<2x8x32xf32>
    tpu.vector_store %arg12[%c0_126, %c0_127, %c0_128], %218 {strides = array<i32>} : memref<2x8x32xf32, #tpu.memory_space<vmem>>, vector<2x8x32xf32>,
    return
  }
}

</mosaic_0001>

<llo_original>
// kernel: tpu_custom_call.1
$region0: #{tpu_custom_call.1}
  #allocation0 [shape = 'u32[]', space=smem, size = 0x4, offset = 0x4, fixed_abs, tag = 'smem constant byte address 0x4 - core index']
  #allocation1 [shape = 'u32[144,128]{1,0:T(1,128)}', space=vmem, size = 0x12000, scoped, tag = 'internal scratch']
  %s0 = inlined_call_operand.vmem [shape: f32[2,8,32], index: 0, kind: input, shape index: {}]
  %s1 = inlined_call_operand.vmem [shape: f32[2,8,32], index: 1, kind: input, shape index: {}]
  %s2 = inlined_call_operand.vmem [shape: f32[2,8,32], index: 2, kind: input, shape index: {}]
  %s3 = inlined_call_operand.vmem [shape: f32[2,8,8], index: 3, kind: input, shape index: {}]
  %s4 = inlined_call_operand.vmem [shape: f32[4,32,8], index: 4, kind: input, shape index: {}]
  %s5 = inlined_call_operand.vmem [shape: f32[4,1,8], index: 5, kind: input, shape index: {}]
  %s6 = inlined_call_operand.vmem [shape: f32[4,32,8], index: 6, kind: input, shape index: {}]
  %s7 = inlined_call_operand.vmem [shape: f32[4,1,8], index: 7, kind: input, shape index: {}]
  %s8 = inlined_call_operand.vmem [shape: f32[4,32,8], index: 8, kind: input, shape index: {}]
  %s9 = inlined_call_operand.vmem [shape: f32[4,1,8], index: 9, kind: input, shape index: {}]
  %s10 = inlined_call_operand.vmem [shape: f32[4,8,32], index: 10, kind: input, shape index: {}]
  %s11 = inlined_call_operand.vmem [shape: f32[1,32], index: 11, kind: input, shape index: {}]
  %s12 = inlined_call_operand.hbm [shape: f32[2,8,32], index: 12, kind: output, shape index: {}]
  %s13 = sld [smem:[#allocation0]]
  $region58: #{tpu_custom_call.1} parent=0
    _
  %s15 = ssub.s32 1, %s13
  %s16 = scalar_select 0, %s15, %s13
  $region1: #{tpu_custom_call.1} parent=0
    #allocation2 [shape = 'u8[8192]{0}', space=vmem, size = 0x2000, scoped, tag = 'output window, operand 0, single buffered']
    #allocation3 [shape = 's32[1]{0}', space=sflag, size = 0x4, scoped, tag = 'scoped memory for tpu_custom_call.1']
    %17 = vsyncpa [#allocation3], 0
    // Predicated region
    $region2: #{tpu_custom_call.1} parent=1 // pred_check
      _
    $region3: #{tpu_custom_call.1} parent=1 // pred_check_branch
      %19 = sbr.rel (0) target = $region5
    $region4: #{tpu_custom_call.1} parent=1 // pred_region
      _
    $region5: #{tpu_custom_call.1} parent=1 // pred_fallthru
      _
    // Predicated region
    $region6: #{tpu_custom_call.1} parent=1 // pred_check
      _
    $region7: #{tpu_custom_call.1} parent=1 // pred_check_branch
      %21 = sbr.rel (0) target = $region9
    $region8: #{tpu_custom_call.1} parent=1 // pred_region
      _
    $region9: #{tpu_custom_call.1} parent=1 // pred_fallthru
      _
    // Predicated region
    $region10: #{tpu_custom_call.1} parent=1 // pred_check
      _
    $region11: #{tpu_custom_call.1} parent=1 // pred_check_branch
      %23 = sbr.rel (0) target = $region13
    $region12: #{tpu_custom_call.1} parent=1 // pred_region
      _
    $region13: #{tpu_custom_call.1} parent=1 // pred_fallthru
      _
    // Predicated region
    $region14: #{tpu_custom_call.1} parent=1 // pred_check
      _
    $region15: #{tpu_custom_call.1} parent=1 // pred_check_branch
      %25 = sbr.rel (0) target = $region17
    $region16: #{tpu_custom_call.1} parent=1 // pred_region
      _
    $region17: #{tpu_custom_call.1} parent=1 // pred_fallthru
      _
    // Predicated region
    $region18: #{tpu_custom_call.1} parent=1 // pred_check
      _
    $region19: #{tpu_custom_call.1} parent=1 // pred_check_branch
      %27 = sbr.rel (0) target = $region21
    $region20: #{tpu_custom_call.1} parent=1 // pred_region
      _
    $region21: #{tpu_custom_call.1} parent=1 // pred_fallthru
      _
    // Predicated region
    $region22: #{tpu_custom_call.1} parent=1 // pred_check
      _
    $region23: #{tpu_custom_call.1} parent=1 // pred_check_branch
      %29 = sbr.rel (0) target = $region25
    $region24: #{tpu_custom_call.1} parent=1 // pred_region
      _
    $region25: #{tpu_custom_call.1} parent=1 // pred_fallthru
      _
    // Predicated region
    $region26: #{tpu_custom_call.1} parent=1 // pred_check
      _
    $region27: #{tpu_custom_call.1} parent=1 // pred_check_branch
      %31 = sbr.rel (0) target = $region29
    $region28: #{tpu_custom_call.1} parent=1 // pred_region
      _
    $region29: #{tpu_custom_call.1} parent=1 // pred_fallthru
      _
    // Predicated region
    $region30: #{tpu_custom_call.1} parent=1 // pred_check
      _
    $region31: #{tpu_custom_call.1} parent=1 // pred_check_branch
      %33 = sbr.rel (0) target = $region33
    $region32: #{tpu_custom_call.1} parent=1 // pred_region
      _
    $region33: #{tpu_custom_call.1} parent=1 // pred_fallthru
      _
    // Predicated region
    $region34: #{tpu_custom_call.1} parent=1 // pred_check
      _
    $region35: #{tpu_custom_call.1} parent=1 // pred_check_branch
      %35 = sbr.rel (0) target = $region37
    $region36: #{tpu_custom_call.1} parent=1 // pred_region
      _
    $region37: #{tpu_custom_call.1} parent=1 // pred_fallthru
      _
    // Predicated region
    $region38: #{tpu_custom_call.1} parent=1 // pred_check
      _
    $region39: #{tpu_custom_call.1} parent=1 // pred_check_branch
      %37 = sbr.rel (0) target = $region41
    $region40: #{tpu_custom_call.1} parent=1 // pred_region
      _
    $region41: #{tpu_custom_call.1} parent=1 // pred_fallthru
      _
    // Predicated region
    $region42: #{tpu_custom_call.1} parent=1 // pred_check
      _
    $region43: #{tpu_custom_call.1} parent=1 // pred_check_branch
      %39 = sbr.rel (0) target = $region45
    $region44: #{tpu_custom_call.1} parent=1 // pred_region
      _
    $region45: #{tpu_custom_call.1} parent=1 // pred_fallthru
      _
    // Predicated region
    $region46: #{tpu_custom_call.1} parent=1 // pred_check
      _
    $region47: #{tpu_custom_call.1} parent=1 // pred_check_branch
      %41 = sbr.rel (0) target = $region49
    $region48: #{tpu_custom_call.1} parent=1 // pred_region
      _
    $region49: #{tpu_custom_call.1} parent=1 // pred_fallthru
      _
    %v43 = vld [vmem:[%s0] sm:$0xff]
    %v44 = vld [vmem:[%s0 + $0x8] sm:$0xff]
    %v45 = vpack.c.bf16 %v44, %v43
    %v46 = vld [vmem:[%s1] sm:$0xff]
    %v47 = vld [vmem:[%s1 + $0x8] sm:$0xff]
    %v48 = vpack.c.bf16 %v47, %v46
    %v49 = vld [vmem:[%s2] sm:$0xff]
    %v50 = vld [vmem:[%s2 + $0x8] sm:$0xff]
    %v51 = vpack.c.bf16 %v50, %v49
    %v52 = vld [vmem:[%s3] sm:$0xff]
    %v53 = vld [vmem:[%s3 + $0x8] sm:$0xff]
    %v54 = vld [vmem:[%s4] sm:$0xff]
    %v55 = vld [vmem:[%s4 + $0x8] sm:$0xff]
    %v56 = vld [vmem:[%s4 + $0x10] sm:$0xff]
    %v57 = vld [vmem:[%s4 + $0x18] sm:$0xff]
    %v58 = vpack.c.bf16 %v55, %v54
    %v59 = vpack.c.bf16 %v57, %v56
    %v60 = vld [vmem:[%s5] sm:$0x1]
    %v62 = vlaneseq
    %v63 = vshrl.u32 %v62, 7
    %v64 = vsub.s32 0, %v63
    %v65 = vrot.slane %v60, %v64
    %vm67 = vcmask 261120
    %v69 = vsel %vm67, %v45, 0
    %71 = vmatprep.subr.bf16.mxu0 0
    %72 = vmatpush1.bf16.msra.mxu0 %v58
    %73 = vmatprep.subr.bf16.mxu0 0
    %74 = vmatpush1.bf16.msra.mxu0 %v59
    %75 = vmatprep.subr.bf16.mxu0 0
    %76 = vmatpush1.bf16.msra.mxu0 0
    %77 = vmatprep.subr.bf16.mxu0 0
    %78 = vmatpush1.bf16.msra.mxu0 0
    %79 = vmatprep.subr.bf16.mxu0 0
    %80 = vmatpush1.bf16.msra.mxu0 0
    %81 = vmatprep.subr.bf16.mxu0 0
    %82 = vmatpush1.bf16.msra.mxu0 0
    %83 = vmatprep.subr.bf16.mxu0 0
    %84 = vmatpush1.bf16.msra.mxu0 0
    %85 = vmatprep.subr.bf16.mxu0 0
    %86 = vmatpush1.bf16.msra.mxu0 0
    %87 = vmatprep.subr.bf16.mxu0 0
    %88 = vmatpush1.bf16.msra.mxu0 0
    %89 = vmatprep.subr.bf16.mxu0 0
    %90 = vmatpush1.bf16.msra.mxu0 0
    %91 = vmatprep.subr.bf16.mxu0 0
    %92 = vmatpush1.bf16.msra.mxu0 0
    %93 = vmatprep.subr.bf16.mxu0 0
    %94 = vmatpush1.bf16.msra.mxu0 0
    %95 = vmatprep.subr.bf16.mxu0 0
    %96 = vmatpush1.bf16.msra.mxu0 0
    %97 = vmatprep.subr.bf16.mxu0 0
    %98 = vmatpush1.bf16.msra.mxu0 0
    %99 = vmatprep.subr.bf16.mxu0 0
    %100 = vmatpush1.bf16.msra.mxu0 0
    %101 = vmatprep.subr.bf16.mxu0 0
    %102 = vmatpush1.bf16.msra.mxu0 0
    %103 = vmatprep.mubr.bf16.mxu0 0
    %104 = vmatmul.mubr.bf16.gmra.mrb[0].mxu0 %v69
    %v105 = vpop.f32.mrb[0].mxu0
    %v106 = vadd.f32 %v65, %v105
    %v107 = vpop.f32.mrb[0].mxu0
    %v108 = vpop.f32.mrb[0].mxu0
    %v109 = vadd.f32 %v65, %v108
    %v110 = vpop.f32.mrb[0].mxu0
    %111 = vdwg.mxu0
    %v112 = vld [vmem:[%s6] sm:$0xff]
    %v113 = vld [vmem:[%s6 + $0x8] sm:$0xff]
    %v114 = vld [vmem:[%s6 + $0x10] sm:$0xff]
    %v115 = vld [vmem:[%s6 + $0x18] sm:$0xff]
    %v116 = vpack.c.bf16 %v113, %v112
    %v117 = vpack.c.bf16 %v115, %v114
    %v118 = vld [vmem:[%s7] sm:$0x1]
    %v120 = vlaneseq
    %v121 = vshrl.u32 %v120, 7
    %v122 = vsub.s32 0, %v121
    %v123 = vrot.slane %v118, %v122
    %v126 = vsel %vm67, %v48, 0
    %128 = vmatprep.subr.bf16.mxu0 0
    %129 = vmatpush1.bf16.msra.mxu0 %v116
    %130 = vmatprep.subr.bf16.mxu0 0
    %131 = vmatpush1.bf16.msra.mxu0 %v117
    %132 = vmatprep.subr.bf16.mxu0 0
    %133 = vmatpush1.bf16.msra.mxu0 0
    %134 = vmatprep.subr.bf16.mxu0 0
    %135 = vmatpush1.bf16.msra.mxu0 0
    %136 = vmatprep.subr.bf16.mxu0 0
    %137 = vmatpush1.bf16.msra.mxu0 0
    %138 = vmatprep.subr.bf16.mxu0 0
    %139 = vmatpush1.bf16.msra.mxu0 0
    %140 = vmatprep.subr.bf16.mxu0 0
    %141 = vmatpush1.bf16.msra.mxu0 0
    %142 = vmatprep.subr.bf16.mxu0 0
    %143 = vmatpush1.bf16.msra.mxu0 0
    %144 = vmatprep.subr.bf16.mxu0 0
    %145 = vmatpush1.bf16.msra.mxu0 0
    %146 = vmatprep.subr.bf16.mxu0 0
    %147 = vmatpush1.bf16.msra.mxu0 0
    %148 = vmatprep.subr.bf16.mxu0 0
    %149 = vmatpush1.bf16.msra.mxu0 0
    %150 = vmatprep.subr.bf16.mxu0 0
    %151 = vmatpush1.bf16.msra.mxu0 0
    %152 = vmatprep.subr.bf16.mxu0 0
    %153 = vmatpush1.bf16.msra.mxu0 0
    %154 = vmatprep.subr.bf16.mxu0 0
    %155 = vmatpush1.bf16.msra.mxu0 0
    %156 = vmatprep.subr.bf16.mxu0 0
    %157 = vmatpush1.bf16.msra.mxu0 0
    %158 = vmatprep.subr.bf16.mxu0 0
    %159 = vmatpush1.bf16.msra.mxu0 0
    %160 = vmatprep.mubr.bf16.mxu0 0
    %161 = vmatmul.mubr.bf16.gmra.mrb[0].mxu0 %v126
    %v162 = vpop.f32.mrb[0].mxu0
    %v163 = vadd.f32 %v123, %v162
    %v164 = vpop.f32.mrb[0].mxu0
    %v165 = vpop.f32.mrb[0].mxu0
    %v166 = vadd.f32 %v123, %v165
    %v167 = vpop.f32.mrb[0].mxu0
    %168 = vdwg.mxu0
    %v169 = vld [vmem:[%s8] sm:$0xff]
    %v170 = vld [vmem:[%s8 + $0x8] sm:$0xff]
    %v171 = vld [vmem:[%s8 + $0x10] sm:$0xff]
    %v172 = vld [vmem:[%s8 + $0x18] sm:$0xff]
    %v173 = vpack.c.bf16 %v170, %v169
    %v174 = vpack.c.bf16 %v172, %v171
    %v175 = vld [vmem:[%s9] sm:$0x1]
    %v177 = vlaneseq
    %v178 = vshrl.u32 %v177, 7
    %v179 = vsub.s32 0, %v178
    %v180 = vrot.slane %v175, %v179
    %v183 = vsel %vm67, %v51, 0
    %185 = vmatprep.subr.bf16.mxu0 0
    %186 = vmatpush1.bf16.msra.mxu0 %v173
    %187 = vmatprep.subr.bf16.mxu0 0
    %188 = vmatpush1.bf16.msra.mxu0 %v174
    %189 = vmatprep.subr.bf16.mxu0 0
    %190 = vmatpush1.bf16.msra.mxu0 0
    %191 = vmatprep.subr.bf16.mxu0 0
    %192 = vmatpush1.bf16.msra.mxu0 0
    %193 = vmatprep.subr.bf16.mxu0 0
    %194 = vmatpush1.bf16.msra.mxu0 0
    %195 = vmatprep.subr.bf16.mxu0 0
    %196 = vmatpush1.bf16.msra.mxu0 0
    %197 = vmatprep.subr.bf16.mxu0 0
    %198 = vmatpush1.bf16.msra.mxu0 0
    %199 = vmatprep.subr.bf16.mxu0 0
    %200 = vmatpush1.bf16.msra.mxu0 0
    %201 = vmatprep.subr.bf16.mxu0 0
    %202 = vmatpush1.bf16.msra.mxu0 0
    %203 = vmatprep.subr.bf16.mxu0 0
    %204 = vmatpush1.bf16.msra.mxu0 0
    %205 = vmatprep.subr.bf16.mxu0 0
    %206 = vmatpush1.bf16.msra.mxu0 0
    %207 = vmatprep.subr.bf16.mxu0 0
    %208 = vmatpush1.bf16.msra.mxu0 0
    %209 = vmatprep.subr.bf16.mxu0 0
    %210 = vmatpush1.bf16.msra.mxu0 0
    %211 = vmatprep.subr.bf16.mxu0 0
    %212 = vmatpush1.bf16.msra.mxu0 0
    %213 = vmatprep.subr.bf16.mxu0 0
    %214 = vmatpush1.bf16.msra.mxu0 0
    %215 = vmatprep.subr.bf16.mxu0 0
    %216 = vmatpush1.bf16.msra.mxu0 0
    %217 = vmatprep.mubr.bf16.mxu0 0
    %218 = vmatmul.mubr.bf16.gmra.mrb[0].mxu0 %v183
    %v219 = vpop.f32.mrb[0].mxu0
    %v220 = vadd.f32 %v180, %v219
    %v221 = vpop.f32.mrb[0].mxu0
    %v222 = vpop.f32.mrb[0].mxu0
    %v223 = vadd.f32 %v180, %v222
    %v224 = vpop.f32.mrb[0].mxu0
    %225 = vdwg.mxu0
    %v226 = vpack.c.bf16 %v106, %v106
    %v227 = vpack.c.bf16 %v109, %v109
    %v228 = vpack.c.bf16 %v163, %v163
    %v229 = vpack.c.bf16 %v166, %v166
    %v230 = vpack.c.bf16 %v220, %v220
    %v231 = vpack.c.bf16 %v223, %v223
    %vm232 = vcmask 64512
    %v234 = vsel %vm232, %v226, 0
    %v237 = vsel %vm232, %v228, 0
    %239 = vmatprep.subr.bf16.mxu0 0
    %240 = vmatpush1.bf16.xpose.msra.mxu0 %v237
    %241 = vmatprep.subr.bf16.mxu0 0
    %242 = vmatpush1.bf16.xpose.msra.mxu0 0
    %243 = vmatprep.subr.bf16.mxu0 0
    %244 = vmatpush1.bf16.xpose.msra.mxu0 0
    %245 = vmatprep.subr.bf16.mxu0 0
    %246 = vmatpush1.bf16.xpose.msra.mxu0 0
    %247 = vmatprep.subr.bf16.mxu0 0
    %248 = vmatpush1.bf16.xpose.msra.mxu0 0
    %249 = vmatprep.subr.bf16.mxu0 0
    %250 = vmatpush1.bf16.xpose.msra.mxu0 0
    %251 = vmatprep.subr.bf16.mxu0 0
    %252 = vmatpush1.bf16.xpose.msra.mxu0 0
    %253 = vmatprep.subr.bf16.mxu0 0
    %254 = vmatpush1.bf16.xpose.msra.mxu0 0
    %255 = vmatprep.subr.bf16.mxu0 0
    %256 = vmatpush1.bf16.xpose.msra.mxu0 0
    %257 = vmatprep.subr.bf16.mxu0 0
    %258 = vmatpush1.bf16.xpose.msra.mxu0 0
    %259 = vmatprep.subr.bf16.mxu0 0
    %260 = vmatpush1.bf16.xpose.msra.mxu0 0
    %261 = vmatprep.subr.bf16.mxu0 0
    %262 = vmatpush1.bf16.xpose.msra.mxu0 0
    %263 = vmatprep.subr.bf16.mxu0 0
    %264 = vmatpush1.bf16.xpose.msra.mxu0 0
    %265 = vmatprep.subr.bf16.mxu0 0
    %266 = vmatpush1.bf16.xpose.msra.mxu0 0
    %267 = vmatprep.subr.bf16.mxu0 0
    %268 = vmatpush1.bf16.xpose.msra.mxu0 0
    %269 = vmatprep.subr.bf16.mxu0 0
    %270 = vmatpush1.bf16.xpose.msra.mxu0 0
    %271 = vmatprep.mubr.bf16.mxu0 0
    %272 = vmatmul.mubr.bf16.gmra.mrb[0].mxu0 %v234
    %v273 = vpop.f32.mrb[0].mxu0
    %v274 = vadd.f32 %v52, %v273
    %v275 = vpop.f32.mrb[0].mxu0
    %v276 = vpop.f32.mrb[0].mxu0
    %v277 = vpop.f32.mrb[0].mxu0
    %278 = vdwg.mxu0
    %v280 = vsel %vm232, %v227, 0
    %v283 = vsel %vm232, %v229, 0
    %285 = vmatprep.subr.bf16.mxu0 0
    %286 = vmatpush1.bf16.xpose.msra.mxu0 %v283
    %287 = vmatprep.subr.bf16.mxu0 0
    %288 = vmatpush1.bf16.xpose.msra.mxu0 0
    %289 = vmatprep.subr.bf16.mxu0 0
    %290 = vmatpush1.bf16.xpose.msra.mxu0 0
    %291 = vmatprep.subr.bf16.mxu0 0
    %292 = vmatpush1.bf16.xpose.msra.mxu0 0
    %293 = vmatprep.subr.bf16.mxu0 0
    %294 = vmatpush1.bf16.xpose.msra.mxu0 0
    %295 = vmatprep.subr.bf16.mxu0 0
    %296 = vmatpush1.bf16.xpose.msra.mxu0 0
    %297 = vmatprep.subr.bf16.mxu0 0
    %298 = vmatpush1.bf16.xpose.msra.mxu0 0
    %299 = vmatprep.subr.bf16.mxu0 0
    %300 = vmatpush1.bf16.xpose.msra.mxu0 0
    %301 = vmatprep.subr.bf16.mxu0 0
    %302 = vmatpush1.bf16.xpose.msra.mxu0 0
    %303 = vmatprep.subr.bf16.mxu0 0
    %304 = vmatpush1.bf16.xpose.msra.mxu0 0
    %305 = vmatprep.subr.bf16.mxu0 0
    %306 = vmatpush1.bf16.xpose.msra.mxu0 0
    %307 = vmatprep.subr.bf16.mxu0 0
    %308 = vmatpush1.bf16.xpose.msra.mxu0 0
    %309 = vmatprep.subr.bf16.mxu0 0
    %310 = vmatpush1.bf16.xpose.msra.mxu0 0
    %311 = vmatprep.subr.bf16.mxu0 0
    %312 = vmatpush1.bf16.xpose.msra.mxu0 0
    %313 = vmatprep.subr.bf16.mxu0 0
    %314 = vmatpush1.bf16.xpose.msra.mxu0 0
    %315 = vmatprep.subr.bf16.mxu0 0
    %316 = vmatpush1.bf16.xpose.msra.mxu0 0
    %317 = vmatprep.mubr.bf16.mxu0 0
    %318 = vmatmul.mubr.bf16.gmra.mrb[0].mxu0 %v280
    %v319 = vpop.f32.mrb[0].mxu0
    %v320 = vadd.f32 %v53, %v319
    %v321 = vpop.f32.mrb[0].mxu0
    %v322 = vpop.f32.mrb[0].mxu0
    %v323 = vpop.f32.mrb[0].mxu0
    %324 = vdwg.mxu0
    %v325 = vsel %vm232, %v274, -inf
    %326 = vmax.xlane.f32.xlu0 %v325
    %v327 = vpop.xlane.xlu0 %326
    %v328 = vsel %vm232, %v320, -inf
    %329 = vmax.xlane.f32.xlu0 %v328
    %v330 = vpop.xlane.xlu0 %329
    %v331 = vsub.f32 %v274, %v327
    %v332 = vsub.f32 %v320, %v330
    %v333 = vmul.f32 %v331, 1.442695
    %v334 = vpow.pop %v333
    %v335 = vmul.f32 %v332, 1.442695
    %v336 = vpow.pop %v335
    %v337 = vsel %vm232, %v334, 0.0
    %338 = vadd.xlane.f32.xlu0 %v337
    %v339 = vpop.xlane.xlu0 %338
    %v340 = vsel %vm232, %v336, 0.0
    %341 = vadd.xlane.f32.xlu0 %v340
    %v342 = vpop.xlane.xlu0 %341
    %v343 = vrcp.pop %v339
    %v344 = vrcp.pop %v342
    %v345 = vmul.f32 %v334, %v343
    %v346 = vmul.f32 %v336, %v344
    %v347 = vpack.c.bf16 %v345, %v345
    %v348 = vpack.c.bf16 %v346, %v346
    %v350 = vsel %vm232, %v347, 0
    %vm352 = vcmask 1043456
    %v354 = vsel %vm352, %v230, 0
    %356 = vmatprep.subr.bf16.mxu0 0
    %357 = vmatpush1.bf16.msra.mxu0 %v354
    %358 = vmatprep.subr.bf16.mxu0 0
    %359 = vmatpush1.bf16.msra.mxu0 0
    %360 = vmatprep.subr.bf16.mxu0 0
    %361 = vmatpush1.bf16.msra.mxu0 0
    %362 = vmatprep.subr.bf16.mxu0 0
    %363 = vmatpush1.bf16.msra.mxu0 0
    %364 = vmatprep.subr.bf16.mxu0 0
    %365 = vmatpush1.bf16.msra.mxu0 0
    %366 = vmatprep.subr.bf16.mxu0 0
    %367 = vmatpush1.bf16.msra.mxu0 0
    %368 = vmatprep.subr.bf16.mxu0 0
    %369 = vmatpush1.bf16.msra.mxu0 0
    %370 = vmatprep.subr.bf16.mxu0 0
    %371 = vmatpush1.bf16.msra.mxu0 0
    %372 = vmatprep.subr.bf16.mxu0 0
    %373 = vmatpush1.bf16.msra.mxu0 0
    %374 = vmatprep.subr.bf16.mxu0 0
    %375 = vmatpush1.bf16.msra.mxu0 0
    %376 = vmatprep.subr.bf16.mxu0 0
    %377 = vmatpush1.bf16.msra.mxu0 0
    %378 = vmatprep.subr.bf16.mxu0 0
    %379 = vmatpush1.bf16.msra.mxu0 0
    %380 = vmatprep.subr.bf16.mxu0 0
    %381 = vmatpush1.bf16.msra.mxu0 0
    %382 = vmatprep.subr.bf16.mxu0 0
    %383 = vmatpush1.bf16.msra.mxu0 0
    %384 = vmatprep.subr.bf16.mxu0 0
    %385 = vmatpush1.bf16.msra.mxu0 0
    %386 = vmatprep.subr.bf16.mxu0 0
    %387 = vmatpush1.bf16.msra.mxu0 0
    %388 = vmatprep.mubr.bf16.mxu0 0
    %389 = vmatmul.mubr.bf16.gmra.mrb[0].mxu0 %v350
    %v390 = vpop.f32.mrb[0].mxu0
    %v391 = vadd.f32 0.0, %v390
    %v392 = vpop.f32.mrb[0].mxu0
    %v393 = vpop.f32.mrb[0].mxu0
    %v394 = vpop.f32.mrb[0].mxu0
    %395 = vdwg.mxu0
    %v397 = vsel %vm232, %v348, 0
    %v400 = vsel %vm352, %v231, 0
    %402 = vmatprep.subr.bf16.mxu0 0
    %403 = vmatpush1.bf16.msra.mxu0 %v400
    %404 = vmatprep.subr.bf16.mxu0 0
    %405 = vmatpush1.bf16.msra.mxu0 0
    %406 = vmatprep.subr.bf16.mxu0 0
    %407 = vmatpush1.bf16.msra.mxu0 0
    %408 = vmatprep.subr.bf16.mxu0 0
    %409 = vmatpush1.bf16.msra.mxu0 0
    %410 = vmatprep.subr.bf16.mxu0 0
    %411 = vmatpush1.bf16.msra.mxu0 0
    %412 = vmatprep.subr.bf16.mxu0 0
    %413 = vmatpush1.bf16.msra.mxu0 0
    %414 = vmatprep.subr.bf16.mxu0 0
    %415 = vmatpush1.bf16.msra.mxu0 0
    %416 = vmatprep.subr.bf16.mxu0 0
    %417 = vmatpush1.bf16.msra.mxu0 0
    %418 = vmatprep.subr.bf16.mxu0 0
    %419 = vmatpush1.bf16.msra.mxu0 0
    %420 = vmatprep.subr.bf16.mxu0 0
    %421 = vmatpush1.bf16.msra.mxu0 0
    %422 = vmatprep.subr.bf16.mxu0 0
    %423 = vmatpush1.bf16.msra.mxu0 0
    %424 = vmatprep.subr.bf16.mxu0 0
    %425 = vmatpush1.bf16.msra.mxu0 0
    %426 = vmatprep.subr.bf16.mxu0 0
    %427 = vmatpush1.bf16.msra.mxu0 0
    %428 = vmatprep.subr.bf16.mxu0 0
    %429 = vmatpush1.bf16.msra.mxu0 0
    %430 = vmatprep.subr.bf16.mxu0 0
    %431 = vmatpush1.bf16.msra.mxu0 0
    %432 = vmatprep.subr.bf16.mxu0 0
    %433 = vmatpush1.bf16.msra.mxu0 0
    %434 = vmatprep.mubr.bf16.mxu0 0
    %435 = vmatmul.mubr.bf16.gmra.mrb[0].mxu0 %v397
    %v436 = vpop.f32.mrb[0].mxu0
    %v437 = vadd.f32 0.0, %v436
    %v438 = vpop.f32.mrb[0].mxu0
    %v439 = vpop.f32.mrb[0].mxu0
    %v440 = vpop.f32.mrb[0].mxu0
    %441 = vdwg.mxu0
    %v442 = vpack.c.bf16 %v437, %v391
    %v443 = vld [vmem:[%s10] sm:$0xff]
    %v444 = vpack.c.bf16 %v443, %v443
    %s445 = scalar_lea.vmem %s4, 32
    %v446 = vld [vmem:[%s445] sm:$0xff]
    %v447 = vld [vmem:[%s445 + $0x8] sm:$0xff]
    %v448 = vld [vmem:[%s445 + $0x10] sm:$0xff]
    %v449 = vld [vmem:[%s445 + $0x18] sm:$0xff]
    %v450 = vpack.c.bf16 %v447, %v446
    %v451 = vpack.c.bf16 %v449, %v448
    %s452 = scalar_lea.vmem %s5, 1
    %v453 = vld [vmem:[%s452] sm:$0x1]
    %v455 = vlaneseq
    %v456 = vshrl.u32 %v455, 7
    %v457 = vsub.s32 0, %v456
    %v458 = vrot.slane %v453, %v457
    %460 = vmatprep.subr.bf16.mxu0 0
    %461 = vmatpush1.bf16.msra.mxu0 %v450
    %462 = vmatprep.subr.bf16.mxu0 0
    %463 = vmatpush1.bf16.msra.mxu0 %v451
    %464 = vmatprep.subr.bf16.mxu0 0
    %465 = vmatpush1.bf16.msra.mxu0 0
    %466 = vmatprep.subr.bf16.mxu0 0
    %467 = vmatpush1.bf16.msra.mxu0 0
    %468 = vmatprep.subr.bf16.mxu0 0
    %469 = vmatpush1.bf16.msra.mxu0 0
    %470 = vmatprep.subr.bf16.mxu0 0
    %471 = vmatpush1.bf16.msra.mxu0 0
    %472 = vmatprep.subr.bf16.mxu0 0
    %473 = vmatpush1.bf16.msra.mxu0 0
    %474 = vmatprep.subr.bf16.mxu0 0
    %475 = vmatpush1.bf16.msra.mxu0 0
    %476 = vmatprep.subr.bf16.mxu0 0
    %477 = vmatpush1.bf16.msra.mxu0 0
    %478 = vmatprep.subr.bf16.mxu0 0
    %479 = vmatpush1.bf16.msra.mxu0 0
    %480 = vmatprep.subr.bf16.mxu0 0
    %481 = vmatpush1.bf16.msra.mxu0 0
    %482 = vmatprep.subr.bf16.mxu0 0
    %483 = vmatpush1.bf16.msra.mxu0 0
    %484 = vmatprep.subr.bf16.mxu0 0
    %485 = vmatpush1.bf16.msra.mxu0 0
    %486 = vmatprep.subr.bf16.mxu0 0
    %487 = vmatpush1.bf16.msra.mxu0 0
    %488 = vmatprep.subr.bf16.mxu0 0
    %489 = vmatpush1.bf16.msra.mxu0 0
    %490 = vmatprep.subr.bf16.mxu0 0
    %491 = vmatpush1.bf16.msra.mxu0 0
    %492 = vmatprep.mubr.bf16.mxu0 0
    %493 = vmatmul.mubr.bf16.gmra.mrb[0].mxu0 %v69
    %v494 = vpop.f32.mrb[0].mxu0
    %v495 = vadd.f32 %v458, %v494
    %v496 = vpop.f32.mrb[0].mxu0
    %v497 = vpop.f32.mrb[0].mxu0
    %v498 = vadd.f32 %v458, %v497
    %v499 = vpop.f32.mrb[0].mxu0
    %500 = vdwg.mxu0
    %s501 = scalar_lea.vmem %s6, 32
    %v502 = vld [vmem:[%s501] sm:$0xff]
    %v503 = vld [vmem:[%s501 + $0x8] sm:$0xff]
    %v504 = vld [vmem:[%s501 + $0x10] sm:$0xff]
    %v505 = vld [vmem:[%s501 + $0x18] sm:$0xff]
    %v506 = vpack.c.bf16 %v503, %v502
    %v507 = vpack.c.bf16 %v505, %v504
    %s508 = scalar_lea.vmem %s7, 1
    %v509 = vld [vmem:[%s508] sm:$0x1]
    %v511 = vlaneseq
    %v512 = vshrl.u32 %v511, 7
    %v513 = vsub.s32 0, %v512
    %v514 = vrot.slane %v509, %v513
    %516 = vmatprep.subr.bf16.mxu0 0
    %517 = vmatpush1.bf16.msra.mxu0 %v506
    %518 = vmatprep.subr.bf16.mxu0 0
    %519 = vmatpush1.bf16.msra.mxu0 %v507
    %520 = vmatprep.subr.bf16.mxu0 0
    %521 = vmatpush1.bf16.msra.mxu0 0
    %522 = vmatprep.subr.bf16.mxu0 0
    %523 = vmatpush1.bf16.msra.mxu0 0
    %524 = vmatprep.subr.bf16.mxu0 0
    %525 = vmatpush1.bf16.msra.mxu0 0
    %526 = vmatprep.subr.bf16.mxu0 0
    %527 = vmatpush1.bf16.msra.mxu0 0
    %528 = vmatprep.subr.bf16.mxu0 0
    %529 = vmatpush1.bf16.msra.mxu0 0
    %530 = vmatprep.subr.bf16.mxu0 0
    %531 = vmatpush1.bf16.msra.mxu0 0
    %532 = vmatprep.subr.bf16.mxu0 0
    %533 = vmatpush1.bf16.msra.mxu0 0
    %534 = vmatprep.subr.bf16.mxu0 0
    %535 = vmatpush1.bf16.msra.mxu0 0
    %536 = vmatprep.subr.bf16.mxu0 0
    %537 = vmatpush1.bf16.msra.mxu0 0
    %538 = vmatprep.subr.bf16.mxu0 0
    %539 = vmatpush1.bf16.msra.mxu0 0
    %540 = vmatprep.subr.bf16.mxu0 0
    %541 = vmatpush1.bf16.msra.mxu0 0
    %542 = vmatprep.subr.bf16.mxu0 0
    %543 = vmatpush1.bf16.msra.mxu0 0
    %544 = vmatprep.subr.bf16.mxu0 0
    %545 = vmatpush1.bf16.msra.mxu0 0
    %546 = vmatprep.subr.bf16.mxu0 0
    %547 = vmatpush1.bf16.msra.mxu0 0
    %548 = vmatprep.mubr.bf16.mxu0 0
    %549 = vmatmul.mubr.bf16.gmra.mrb[0].mxu0 %v126
    %v550 = vpop.f32.mrb[0].mxu0
    %v551 = vadd.f32 %v514, %v550
    %v552 = vpop.f32.mrb[0].mxu0
    %v553 = vpop.f32.mrb[0].mxu0
    %v554 = vadd.f32 %v514, %v553
    %v555 = vpop.f32.mrb[0].mxu0
    %556 = vdwg.mxu0
    %s557 = scalar_lea.vmem %s8, 32
    %v558 = vld [vmem:[%s557] sm:$0xff]
    %v559 = vld [vmem:[%s557 + $0x8] sm:$0xff]
    %v560 = vld [vmem:[%s557 + $0x10] sm:$0xff]
    %v561 = vld [vmem:[%s557 + $0x18] sm:$0xff]
    %v562 = vpack.c.bf16 %v559, %v558
    %v563 = vpack.c.bf16 %v561, %v560
    %s564 = scalar_lea.vmem %s9, 1
    %v565 = vld [vmem:[%s564] sm:$0x1]
    %v567 = vlaneseq
    %v568 = vshrl.u32 %v567, 7
    %v569 = vsub.s32 0, %v568
    %v570 = vrot.slane %v565, %v569
    %572 = vmatprep.subr.bf16.mxu0 0
    %573 = vmatpush1.bf16.msra.mxu0 %v562
    %574 = vmatprep.subr.bf16.mxu0 0
    %575 = vmatpush1.bf16.msra.mxu0 %v563
    %576 = vmatprep.subr.bf16.mxu0 0
    %577 = vmatpush1.bf16.msra.mxu0 0
    %578 = vmatprep.subr.bf16.mxu0 0
    %579 = vmatpush1.bf16.msra.mxu0 0
    %580 = vmatprep.subr.bf16.mxu0 0
    %581 = vmatpush1.bf16.msra.mxu0 0
    %582 = vmatprep.subr.bf16.mxu0 0
    %583 = vmatpush1.bf16.msra.mxu0 0
    %584 = vmatprep.subr.bf16.mxu0 0
    %585 = vmatpush1.bf16.msra.mxu0 0
    %586 = vmatprep.subr.bf16.mxu0 0
    %587 = vmatpush1.bf16.msra.mxu0 0
    %588 = vmatprep.subr.bf16.mxu0 0
    %589 = vmatpush1.bf16.msra.mxu0 0
    %590 = vmatprep.subr.bf16.mxu0 0
    %591 = vmatpush1.bf16.msra.mxu0 0
    %592 = vmatprep.subr.bf16.mxu0 0
    %593 = vmatpush1.bf16.msra.mxu0 0
    %594 = vmatprep.subr.bf16.mxu0 0
    %595 = vmatpush1.bf16.msra.mxu0 0
    %596 = vmatprep.subr.bf16.mxu0 0
    %597 = vmatpush1.bf16.msra.mxu0 0
    %598 = vmatprep.subr.bf16.mxu0 0
    %599 = vmatpush1.bf16.msra.mxu0 0
    %600 = vmatprep.subr.bf16.mxu0 0
    %601 = vmatpush1.bf16.msra.mxu0 0
    %602 = vmatprep.subr.bf16.mxu0 0
    %603 = vmatpush1.bf16.msra.mxu0 0
    %604 = vmatprep.mubr.bf16.mxu0 0
    %605 = vmatmul.mubr.bf16.gmra.mrb[0].mxu0 %v183
    %v606 = vpop.f32.mrb[0].mxu0
    %v607 = vadd.f32 %v570, %v606
    %v608 = vpop.f32.mrb[0].mxu0
    %v609 = vpop.f32.mrb[0].mxu0
    %v610 = vadd.f32 %v570, %v609
    %v611 = vpop.f32.mrb[0].mxu0
    %612 = vdwg.mxu0
    %v613 = vpack.c.bf16 %v495, %v495
    %v614 = vpack.c.bf16 %v498, %v498
    %v615 = vpack.c.bf16 %v551, %v551
    %v616 = vpack.c.bf16 %v554, %v554
    %v617 = vpack.c.bf16 %v607, %v607
    %v618 = vpack.c.bf16 %v610, %v610
    %v620 = vsel %vm232, %v613, 0
    %v623 = vsel %vm232, %v615, 0
    %625 = vmatprep.subr.bf16.mxu0 0
    %626 = vmatpush1.bf16.xpose.msra.mxu0 %v623
    %627 = vmatprep.subr.bf16.mxu0 0
    %628 = vmatpush1.bf16.xpose.msra.mxu0 0
    %629 = vmatprep.subr.bf16.mxu0 0
    %630 = vmatpush1.bf16.xpose.msra.mxu0 0
    %631 = vmatprep.subr.bf16.mxu0 0
    %632 = vmatpush1.bf16.xpose.msra.mxu0 0
    %633 = vmatprep.subr.bf16.mxu0 0
    %634 = vmatpush1.bf16.xpose.msra.mxu0 0
    %635 = vmatprep.subr.bf16.mxu0 0
    %636 = vmatpush1.bf16.xpose.msra.mxu0 0
    %637 = vmatprep.subr.bf16.mxu0 0
    %638 = vmatpush1.bf16.xpose.msra.mxu0 0
    %639 = vmatprep.subr.bf16.mxu0 0
    %640 = vmatpush1.bf16.xpose.msra.mxu0 0
    %641 = vmatprep.subr.bf16.mxu0 0
    %642 = vmatpush1.bf16.xpose.msra.mxu0 0
    %643 = vmatprep.subr.bf16.mxu0 0
    %644 = vmatpush1.bf16.xpose.msra.mxu0 0
    %645 = vmatprep.subr.bf16.mxu0 0
    %646 = vmatpush1.bf16.xpose.msra.mxu0 0
    %647 = vmatprep.subr.bf16.mxu0 0
    %648 = vmatpush1.bf16.xpose.msra.mxu0 0
    %649 = vmatprep.subr.bf16.mxu0 0
    %650 = vmatpush1.bf16.xpose.msra.mxu0 0
    %651 = vmatprep.subr.bf16.mxu0 0
    %652 = vmatpush1.bf16.xpose.msra.mxu0 0
    %653 = vmatprep.subr.bf16.mxu0 0
    %654 = vmatpush1.bf16.xpose.msra.mxu0 0
    %655 = vmatprep.subr.bf16.mxu0 0
    %656 = vmatpush1.bf16.xpose.msra.mxu0 0
    %657 = vmatprep.mubr.bf16.mxu0 0
    %658 = vmatmul.mubr.bf16.gmra.mrb[0].mxu0 %v620
    %v659 = vpop.f32.mrb[0].mxu0
    %v660 = vadd.f32 %v52, %v659
    %v661 = vpop.f32.mrb[0].mxu0
    %v662 = vpop.f32.mrb[0].mxu0
    %v663 = vpop.f32.mrb[0].mxu0
    %664 = vdwg.mxu0
    %v666 = vsel %vm232, %v614, 0
    %v669 = vsel %vm232, %v616, 0
    %671 = vmatprep.subr.bf16.mxu0 0
    %672 = vmatpush1.bf16.xpose.msra.mxu0 %v669
    %673 = vmatprep.subr.bf16.mxu0 0
    %674 = vmatpush1.bf16.xpose.msra.mxu0 0
    %675 = vmatprep.subr.bf16.mxu0 0
    %676 = vmatpush1.bf16.xpose.msra.mxu0 0
    %677 = vmatprep.subr.bf16.mxu0 0
    %678 = vmatpush1.bf16.xpose.msra.mxu0 0
    %679 = vmatprep.subr.bf16.mxu0 0
    %680 = vmatpush1.bf16.xpose.msra.mxu0 0
    %681 = vmatprep.subr.bf16.mxu0 0
    %682 = vmatpush1.bf16.xpose.msra.mxu0 0
    %683 = vmatprep.subr.bf16.mxu0 0
    %684 = vmatpush1.bf16.xpose.msra.mxu0 0
    %685 = vmatprep.subr.bf16.mxu0 0
    %686 = vmatpush1.bf16.xpose.msra.mxu0 0
    %687 = vmatprep.subr.bf16.mxu0 0
    %688 = vmatpush1.bf16.xpose.msra.mxu0 0
    %689 = vmatprep.subr.bf16.mxu0 0
    %690 = vmatpush1.bf16.xpose.msra.mxu0 0
    %691 = vmatprep.subr.bf16.mxu0 0
    %692 = vmatpush1.bf16.xpose.msra.mxu0 0
    %693 = vmatprep.subr.bf16.mxu0 0
    %694 = vmatpush1.bf16.xpose.msra.mxu0 0
    %695 = vmatprep.subr.bf16.mxu0 0
    %696 = vmatpush1.bf16.xpose.msra.mxu0 0
    %697 = vmatprep.subr.bf16.mxu0 0
    %698 = vmatpush1.bf16.xpose.msra.mxu0 0
    %699 = vmatprep.subr.bf16.mxu0 0
    %700 = vmatpush1.bf16.xpose.msra.mxu0 0
    %701 = vmatprep.subr.bf16.mxu0 0
    %702 = vmatpush1.bf16.xpose.msra.mxu0 0
    %703 = vmatprep.mubr.bf16.mxu0 0
    %704 = vmatmul.mubr.bf16.gmra.mrb[0].mxu0 %v666
    %v705 = vpop.f32.mrb[0].mxu0
    %v706 = vadd.f32 %v53, %v705
    %v707 = vpop.f32.mrb[0].mxu0
    %v708 = vpop.f32.mrb[0].mxu0
    %v709 = vpop.f32.mrb[0].mxu0
    %710 = vdwg.mxu0
    %v711 = vsel %vm232, %v660, -inf
    %712 = vmax.xlane.f32.xlu0 %v711
    %v713 = vpop.xlane.xlu0 %712
    %v714 = vsel %vm232, %v706, -inf
    %715 = vmax.xlane.f32.xlu0 %v714
    %v716 = vpop.xlane.xlu0 %715
    %v717 = vsub.f32 %v660, %v713
    %v718 = vsub.f32 %v706, %v716
    %v719 = vmul.f32 %v717, 1.442695
    %v720 = vpow.pop %v719
    %v721 = vmul.f32 %v718, 1.442695
    %v722 = vpow.pop %v721
    %v723 = vsel %vm232, %v720, 0.0
    %724 = vadd.xlane.f32.xlu0 %v723
    %v725 = vpop.xlane.xlu0 %724
    %v726 = vsel %vm232, %v722, 0.0
    %727 = vadd.xlane.f32.xlu0 %v726
    %v728 = vpop.xlane.xlu0 %727
    %v729 = vrcp.pop %v725
    %v730 = vrcp.pop %v728
    %v731 = vmul.f32 %v720, %v729
    %v732 = vmul.f32 %v722, %v730
    %v733 = vpack.c.bf16 %v731, %v731
    %v734 = vpack.c.bf16 %v732, %v732
    %v736 = vsel %vm232, %v733, 0
    %v739 = vsel %vm352, %v617, 0
    %741 = vmatprep.subr.bf16.mxu0 0
    %742 = vmatpush1.bf16.msra.mxu0 %v739
    %743 = vmatprep.subr.bf16.mxu0 0
    %744 = vmatpush1.bf16.msra.mxu0 0
    %745 = vmatprep.subr.bf16.mxu0 0
    %746 = vmatpush1.bf16.msra.mxu0 0
    %747 = vmatprep.subr.bf16.mxu0 0
    %748 = vmatpush1.bf16.msra.mxu0 0
    %749 = vmatprep.subr.bf16.mxu0 0
    %750 = vmatpush1.bf16.msra.mxu0 0
    %751 = vmatprep.subr.bf16.mxu0 0
    %752 = vmatpush1.bf16.msra.mxu0 0
    %753 = vmatprep.subr.bf16.mxu0 0
    %754 = vmatpush1.bf16.msra.mxu0 0
    %755 = vmatprep.subr.bf16.mxu0 0
    %756 = vmatpush1.bf16.msra.mxu0 0
    %757 = vmatprep.subr.bf16.mxu0 0
    %758 = vmatpush1.bf16.msra.mxu0 0
    %759 = vmatprep.subr.bf16.mxu0 0
    %760 = vmatpush1.bf16.msra.mxu0 0
    %761 = vmatprep.subr.bf16.mxu0 0
    %762 = vmatpush1.bf16.msra.mxu0 0
    %763 = vmatprep.subr.bf16.mxu0 0
    %764 = vmatpush1.bf16.msra.mxu0 0
    %765 = vmatprep.subr.bf16.mxu0 0
    %766 = vmatpush1.bf16.msra.mxu0 0
    %767 = vmatprep.subr.bf16.mxu0 0
    %768 = vmatpush1.bf16.msra.mxu0 0
    %769 = vmatprep.subr.bf16.mxu0 0
    %770 = vmatpush1.bf16.msra.mxu0 0
    %771 = vmatprep.subr.bf16.mxu0 0
    %772 = vmatpush1.bf16.msra.mxu0 0
    %773 = vmatprep.mubr.bf16.mxu0 0
    %774 = vmatmul.mubr.bf16.gmra.mrb[0].mxu0 %v736
    %v775 = vpop.f32.mrb[0].mxu0
    %v776 = vadd.f32 0.0, %v775
    %v777 = vpop.f32.mrb[0].mxu0
    %v778 = vpop.f32.mrb[0].mxu0
    %v779 = vpop.f32.mrb[0].mxu0
    %780 = vdwg.mxu0
    %v782 = vsel %vm232, %v734, 0
    %v785 = vsel %vm352, %v618, 0
    %787 = vmatprep.subr.bf16.mxu0 0
    %788 = vmatpush1.bf16.msra.mxu0 %v785
    %789 = vmatprep.subr.bf16.mxu0 0
    %790 = vmatpush1.bf16.msra.mxu0 0
    %791 = vmatprep.subr.bf16.mxu0 0
    %792 = vmatpush1.bf16.msra.mxu0 0
    %793 = vmatprep.subr.bf16.mxu0 0
    %794 = vmatpush1.bf16.msra.mxu0 0
    %795 = vmatprep.subr.bf16.mxu0 0
    %796 = vmatpush1.bf16.msra.mxu0 0
    %797 = vmatprep.subr.bf16.mxu0 0
    %798 = vmatpush1.bf16.msra.mxu0 0
    %799 = vmatprep.subr.bf16.mxu0 0
    %800 = vmatpush1.bf16.msra.mxu0 0
    %801 = vmatprep.subr.bf16.mxu0 0
    %802 = vmatpush1.bf16.msra.mxu0 0
    %803 = vmatprep.subr.bf16.mxu0 0
    %804 = vmatpush1.bf16.msra.mxu0 0
    %805 = vmatprep.subr.bf16.mxu0 0
    %806 = vmatpush1.bf16.msra.mxu0 0
    %807 = vmatprep.subr.bf16.mxu0 0
    %808 = vmatpush1.bf16.msra.mxu0 0
    %809 = vmatprep.subr.bf16.mxu0 0
    %810 = vmatpush1.bf16.msra.mxu0 0
    %811 = vmatprep.subr.bf16.mxu0 0
    %812 = vmatpush1.bf16.msra.mxu0 0
    %813 = vmatprep.subr.bf16.mxu0 0
    %814 = vmatpush1.bf16.msra.mxu0 0
    %815 = vmatprep.subr.bf16.mxu0 0
    %816 = vmatpush1.bf16.msra.mxu0 0
    %817 = vmatprep.subr.bf16.mxu0 0
    %818 = vmatpush1.bf16.msra.mxu0 0
    %819 = vmatprep.mubr.bf16.mxu0 0
    %820 = vmatmul.mubr.bf16.gmra.mrb[0].mxu0 %v782
    %v821 = vpop.f32.mrb[0].mxu0
    %v822 = vadd.f32 0.0, %v821
    %v823 = vpop.f32.mrb[0].mxu0
    %v824 = vpop.f32.mrb[0].mxu0
    %v825 = vpop.f32.mrb[0].mxu0
    %826 = vdwg.mxu0
    %v827 = vpack.c.bf16 %v822, %v776
    %s828 = scalar_lea.vmem %s10, 8
    %v829 = vld [vmem:[%s828] sm:$0xff]
    %v830 = vpack.c.bf16 %v829, %v829
    %v832 = vsel %vm232, %v827, 0
    %v835 = vsel %vm352, %v830, 0
    %837 = vmatprep.subr.bf16.mxu0 0
    %838 = vmatpush1.bf16.msra.mxu0 %v835
    %839 = vmatprep.subr.bf16.mxu0 0
    %840 = vmatpush1.bf16.msra.mxu0 0
    %841 = vmatprep.subr.bf16.mxu0 0
    %842 = vmatpush1.bf16.msra.mxu0 0
    %843 = vmatprep.subr.bf16.mxu0 0
    %844 = vmatpush1.bf16.msra.mxu0 0
    %845 = vmatprep.subr.bf16.mxu0 0
    %846 = vmatpush1.bf16.msra.mxu0 0
    %847 = vmatprep.subr.bf16.mxu0 0
    %848 = vmatpush1.bf16.msra.mxu0 0
    %849 = vmatprep.subr.bf16.mxu0 0
    %850 = vmatpush1.bf16.msra.mxu0 0
    %851 = vmatprep.subr.bf16.mxu0 0
    %852 = vmatpush1.bf16.msra.mxu0 0
    %853 = vmatprep.subr.bf16.mxu0 0
    %854 = vmatpush1.bf16.msra.mxu0 0
    %855 = vmatprep.subr.bf16.mxu0 0
    %856 = vmatpush1.bf16.msra.mxu0 0
    %857 = vmatprep.subr.bf16.mxu0 0
    %858 = vmatpush1.bf16.msra.mxu0 0
    %859 = vmatprep.subr.bf16.mxu0 0
    %860 = vmatpush1.bf16.msra.mxu0 0
    %861 = vmatprep.subr.bf16.mxu0 0
    %862 = vmatpush1.bf16.msra.mxu0 0
    %863 = vmatprep.subr.bf16.mxu0 0
    %864 = vmatpush1.bf16.msra.mxu0 0
    %865 = vmatprep.subr.bf16.mxu0 0
    %866 = vmatpush1.bf16.msra.mxu0 0
    %867 = vmatprep.subr.bf16.mxu0 0
    %868 = vmatpush1.bf16.msra.mxu0 0
    %869 = vmatprep.mubr.bf16.mxu0 0
    %870 = vmatmul.mubr.bf16.gmra.mrb[0].mxu0 %v832
    %v871 = vpop.f32.mrb[0].mxu0
    %v872 = vadd.f32 0.0, %v871
    %v873 = vpop.f32.mrb[0].mxu0
    %v874 = vpop.f32.mrb[0].mxu0
    %v875 = vadd.f32 0.0, %v874
    %v876 = vpop.f32.mrb[0].mxu0
    %877 = vdwg.mxu0
    %v879 = vsel %vm232, %v442, 0
    %v882 = vsel %vm352, %v444, 0
    %884 = vmatprep.subr.bf16.mxu0 0
    %885 = vmatpush1.bf16.msra.mxu0 %v882
    %886 = vmatprep.subr.bf16.mxu0 0
    %887 = vmatpush1.bf16.msra.mxu0 0
    %888 = vmatprep.subr.bf16.mxu0 0
    %889 = vmatpush1.bf16.msra.mxu0 0
    %890 = vmatprep.subr.bf16.mxu0 0
    %891 = vmatpush1.bf16.msra.mxu0 0
    %892 = vmatprep.subr.bf16.mxu0 0
    %893 = vmatpush1.bf16.msra.mxu0 0
    %894 = vmatprep.subr.bf16.mxu0 0
    %895 = vmatpush1.bf16.msra.mxu0 0
    %896 = vmatprep.subr.bf16.mxu0 0
    %897 = vmatpush1.bf16.msra.mxu0 0
    %898 = vmatprep.subr.bf16.mxu0 0
    %899 = vmatpush1.bf16.msra.mxu0 0
    %900 = vmatprep.subr.bf16.mxu0 0
    %901 = vmatpush1.bf16.msra.mxu0 0
    %902 = vmatprep.subr.bf16.mxu0 0
    %903 = vmatpush1.bf16.msra.mxu0 0
    %904 = vmatprep.subr.bf16.mxu0 0
    %905 = vmatpush1.bf16.msra.mxu0 0
    %906 = vmatprep.subr.bf16.mxu0 0
    %907 = vmatpush1.bf16.msra.mxu0 0
    %908 = vmatprep.subr.bf16.mxu0 0
    %909 = vmatpush1.bf16.msra.mxu0 0
    %910 = vmatprep.subr.bf16.mxu0 0
    %911 = vmatpush1.bf16.msra.mxu0 0
    %912 = vmatprep.subr.bf16.mxu0 0
    %913 = vmatpush1.bf16.msra.mxu0 0
    %914 = vmatprep.subr.bf16.mxu0 0
    %915 = vmatpush1.bf16.msra.mxu0 0
    %916 = vmatprep.mubr.bf16.mxu0 0
    %917 = vmatmul.mubr.bf16.gmra.mrb[0].mxu0 %v879
    %v918 = vpop.f32.mrb[0].mxu0
    %v919 = vadd.f32 %v872, %v918
    %v920 = vpop.f32.mrb[0].mxu0
    %v921 = vpop.f32.mrb[0].mxu0
    %v922 = vadd.f32 %v875, %v921
    %v923 = vpop.f32.mrb[0].mxu0
    %924 = vdwg.mxu0
    %s925 = scalar_lea.vmem %s4, 64
    %v926 = vld [vmem:[%s925] sm:$0xff]
    %v927 = vld [vmem:[%s925 + $0x8] sm:$0xff]
    %v928 = vld [vmem:[%s925 + $0x10] sm:$0xff]
    %v929 = vld [vmem:[%s925 + $0x18] sm:$0xff]
    %v930 = vpack.c.bf16 %v927, %v926
    %v931 = vpack.c.bf16 %v929, %v928
    %s932 = scalar_lea.vmem %s5, 2
    %v933 = vld [vmem:[%s932] sm:$0x1]
    %v935 = vlaneseq
    %v936 = vshrl.u32 %v935, 7
    %v937 = vsub.s32 0, %v936
    %v938 = vrot.slane %v933, %v937
    %940 = vmatprep.subr.bf16.mxu0 0
    %941 = vmatpush1.bf16.msra.mxu0 %v930
    %942 = vmatprep.subr.bf16.mxu0 0
    %943 = vmatpush1.bf16.msra.mxu0 %v931
    %944 = vmatprep.subr.bf16.mxu0 0
    %945 = vmatpush1.bf16.msra.mxu0 0
    %946 = vmatprep.subr.bf16.mxu0 0
    %947 = vmatpush1.bf16.msra.mxu0 0
    %948 = vmatprep.subr.bf16.mxu0 0
    %949 = vmatpush1.bf16.msra.mxu0 0
    %950 = vmatprep.subr.bf16.mxu0 0
    %951 = vmatpush1.bf16.msra.mxu0 0
    %952 = vmatprep.subr.bf16.mxu0 0
    %953 = vmatpush1.bf16.msra.mxu0 0
    %954 = vmatprep.subr.bf16.mxu0 0
    %955 = vmatpush1.bf16.msra.mxu0 0
    %956 = vmatprep.subr.bf16.mxu0 0
    %957 = vmatpush1.bf16.msra.mxu0 0
    %958 = vmatprep.subr.bf16.mxu0 0
    %959 = vmatpush1.bf16.msra.mxu0 0
    %960 = vmatprep.subr.bf16.mxu0 0
    %961 = vmatpush1.bf16.msra.mxu0 0
    %962 = vmatprep.subr.bf16.mxu0 0
    %963 = vmatpush1.bf16.msra.mxu0 0
    %964 = vmatprep.subr.bf16.mxu0 0
    %965 = vmatpush1.bf16.msra.mxu0 0
    %966 = vmatprep.subr.bf16.mxu0 0
    %967 = vmatpush1.bf16.msra.mxu0 0
    %968 = vmatprep.subr.bf16.mxu0 0
    %969 = vmatpush1.bf16.msra.mxu0 0
    %970 = vmatprep.subr.bf16.mxu0 0
    %971 = vmatpush1.bf16.msra.mxu0 0
    %972 = vmatprep.mubr.bf16.mxu0 0
    %973 = vmatmul.mubr.bf16.gmra.mrb[0].mxu0 %v69
    %v974 = vpop.f32.mrb[0].mxu0
    %v975 = vadd.f32 %v938, %v974
    %v976 = vpop.f32.mrb[0].mxu0
    %v977 = vpop.f32.mrb[0].mxu0
    %v978 = vadd.f32 %v938, %v977
    %v979 = vpop.f32.mrb[0].mxu0
    %980 = vdwg.mxu0
    %s981 = scalar_lea.vmem %s6, 64
    %v982 = vld [vmem:[%s981] sm:$0xff]
    %v983 = vld [vmem:[%s981 + $0x8] sm:$0xff]
    %v984 = vld [vmem:[%s981 + $0x10] sm:$0xff]
    %v985 = vld [vmem:[%s981 + $0x18] sm:$0xff]
    %v986 = vpack.c.bf16 %v983, %v982
    %v987 = vpack.c.bf16 %v985, %v984
    %s988 = scalar_lea.vmem %s7, 2
    %v989 = vld [vmem:[%s988] sm:$0x1]
    %v991 = vlaneseq
    %v992 = vshrl.u32 %v991, 7
    %v993 = vsub.s32 0, %v992
    %v994 = vrot.slane %v989, %v993
    %996 = vmatprep.subr.bf16.mxu0 0
    %997 = vmatpush1.bf16.msra.mxu0 %v986
    %998 = vmatprep.subr.bf16.mxu0 0
    %999 = vmatpush1.bf16.msra.mxu0 %v987
    %1000 = vmatprep.subr.bf16.mxu0 0
    %1001 = vmatpush1.bf16.msra.mxu0 0
    %1002 = vmatprep.subr.bf16.mxu0 0
    %1003 = vmatpush1.bf16.msra.mxu0 0
    %1004 = vmatprep.subr.bf16.mxu0 0
    %1005 = vmatpush1.bf16.msra.mxu0 0
    %1006 = vmatprep.subr.bf16.mxu0 0
    %1007 = vmatpush1.bf16.msra.mxu0 0
    %1008 = vmatprep.subr.bf16.mxu0 0
    %1009 = vmatpush1.bf16.msra.mxu0 0
    %1010 = vmatprep.subr.bf16.mxu0 0
    %1011 = vmatpush1.bf16.msra.mxu0 0
    %1012 = vmatprep.subr.bf16.mxu0 0
    %1013 = vmatpush1.bf16.msra.mxu0 0
    %1014 = vmatprep.subr.bf16.mxu0 0
    %1015 = vmatpush1.bf16.msra.mxu0 0
    %1016 = vmatprep.subr.bf16.mxu0 0
    %1017 = vmatpush1.bf16.msra.mxu0 0
    %1018 = vmatprep.subr.bf16.mxu0 0
    %1019 = vmatpush1.bf16.msra.mxu0 0
    %1020 = vmatprep.subr.bf16.mxu0 0
    %1021 = vmatpush1.bf16.msra.mxu0 0
    %1022 = vmatprep.subr.bf16.mxu0 0
    %1023 = vmatpush1.bf16.msra.mxu0 0
    %1024 = vmatprep.subr.bf16.mxu0 0
    %1025 = vmatpush1.bf16.msra.mxu0 0
    %1026 = vmatprep.subr.bf16.mxu0 0
    %1027 = vmatpush1.bf16.msra.mxu0 0
    %1028 = vmatprep.mubr.bf16.mxu0 0
    %1029 = vmatmul.mubr.bf16.gmra.mrb[0].mxu0 %v126
    %v1030 = vpop.f32.mrb[0].mxu0
    %v1031 = vadd.f32 %v994, %v1030
    %v1032 = vpop.f32.mrb[0].mxu0
    %v1033 = vpop.f32.mrb[0].mxu0
    %v1034 = vadd.f32 %v994, %v1033
    %v1035 = vpop.f32.mrb[0].mxu0
    %1036 = vdwg.mxu0
    %s1037 = scalar_lea.vmem %s8, 64
    %v1038 = vld [vmem:[%s1037] sm:$0xff]
    %v1039 = vld [vmem:[%s1037 + $0x8] sm:$0xff]
    %v1040 = vld [vmem:[%s1037 + $0x10] sm:$0xff]
    %v1041 = vld [vmem:[%s1037 + $0x18] sm:$0xff]
    %v1042 = vpack.c.bf16 %v1039, %v1038
    %v1043 = vpack.c.bf16 %v1041, %v1040
    %s1044 = scalar_lea.vmem %s9, 2
    %v1045 = vld [vmem:[%s1044] sm:$0x1]
    %v1047 = vlaneseq
    %v1048 = vshrl.u32 %v1047, 7
    %v1049 = vsub.s32 0, %v1048
    %v1050 = vrot.slane %v1045, %v1049
    %1052 = vmatprep.subr.bf16.mxu0 0
    %1053 = vmatpush1.bf16.msra.mxu0 %v1042
    %1054 = vmatprep.subr.bf16.mxu0 0
    %1055 = vmatpush1.bf16.msra.mxu0 %v1043
    %1056 = vmatprep.subr.bf16.mxu0 0
    %1057 = vmatpush1.bf16.msra.mxu0 0
    %1058 = vmatprep.subr.bf16.mxu0 0
    %1059 = vmatpush1.bf16.msra.mxu0 0
    %1060 = vmatprep.subr.bf16.mxu0 0
    %1061 = vmatpush1.bf16.msra.mxu0 0
    %1062 = vmatprep.subr.bf16.mxu0 0
    %1063 = vmatpush1.bf16.msra.mxu0 0
    %1064 = vmatprep.subr.bf16.mxu0 0
    %1065 = vmatpush1.bf16.msra.mxu0 0
    %1066 = vmatprep.subr.bf16.mxu0 0
    %1067 = vmatpush1.bf16.msra.mxu0 0
    %1068 = vmatprep.subr.bf16.mxu0 0
    %1069 = vmatpush1.bf16.msra.mxu0 0
    %1070 = vmatprep.subr.bf16.mxu0 0
    %1071 = vmatpush1.bf16.msra.mxu0 0
    %1072 = vmatprep.subr.bf16.mxu0 0
    %1073 = vmatpush1.bf16.msra.mxu0 0
    %1074 = vmatprep.subr.bf16.mxu0 0
    %1075 = vmatpush1.bf16.msra.mxu0 0
    %1076 = vmatprep.subr.bf16.mxu0 0
    %1077 = vmatpush1.bf16.msra.mxu0 0
    %1078 = vmatprep.subr.bf16.mxu0 0
    %1079 = vmatpush1.bf16.msra.mxu0 0
    %1080 = vmatprep.subr.bf16.mxu0 0
    %1081 = vmatpush1.bf16.msra.mxu0 0
    %1082 = vmatprep.subr.bf16.mxu0 0
    %1083 = vmatpush1.bf16.msra.mxu0 0
    %1084 = vmatprep.mubr.bf16.mxu0 0
    %1085 = vmatmul.mubr.bf16.gmra.mrb[0].mxu0 %v183
    %v1086 = vpop.f32.mrb[0].mxu0
    %v1087 = vadd.f32 %v1050, %v1086
    %v1088 = vpop.f32.mrb[0].mxu0
    %v1089 = vpop.f32.mrb[0].mxu0
    %v1090 = vadd.f32 %v1050, %v1089
    %v1091 = vpop.f32.mrb[0].mxu0
    %1092 = vdwg.mxu0
    %v1093 = vpack.c.bf16 %v975, %v975
    %v1094 = vpack.c.bf16 %v978, %v978
    %v1095 = vpack.c.bf16 %v1031, %v1031
    %v1096 = vpack.c.bf16 %v1034, %v1034
    %v1097 = vpack.c.bf16 %v1087, %v1087
    %v1098 = vpack.c.bf16 %v1090, %v1090
    %v1100 = vsel %vm232, %v1093, 0
    %v1103 = vsel %vm232, %v1095, 0
    %1105 = vmatprep.subr.bf16.mxu0 0
    %1106 = vmatpush1.bf16.xpose.msra.mxu0 %v1103
    %1107 = vmatprep.subr.bf16.mxu0 0
    %1108 = vmatpush1.bf16.xpose.msra.mxu0 0
    %1109 = vmatprep.subr.bf16.mxu0 0
    %1110 = vmatpush1.bf16.xpose.msra.mxu0 0
    %1111 = vmatprep.subr.bf16.mxu0 0
    %1112 = vmatpush1.bf16.xpose.msra.mxu0 0
    %1113 = vmatprep.subr.bf16.mxu0 0
    %1114 = vmatpush1.bf16.xpose.msra.mxu0 0
    %1115 = vmatprep.subr.bf16.mxu0 0
    %1116 = vmatpush1.bf16.xpose.msra.mxu0 0
    %1117 = vmatprep.subr.bf16.mxu0 0
    %1118 = vmatpush1.bf16.xpose.msra.mxu0 0
    %1119 = vmatprep.subr.bf16.mxu0 0
    %1120 = vmatpush1.bf16.xpose.msra.mxu0 0
    %1121 = vmatprep.subr.bf16.mxu0 0
    %1122 = vmatpush1.bf16.xpose.msra.mxu0 0
    %1123 = vmatprep.subr.bf16.mxu0 0
    %1124 = vmatpush1.bf16.xpose.msra.mxu0 0
    %1125 = vmatprep.subr.bf16.mxu0 0
    %1126 = vmatpush1.bf16.xpose.msra.mxu0 0
    %1127 = vmatprep.subr.bf16.mxu0 0
    %1128 = vmatpush1.bf16.xpose.msra.mxu0 0
    %1129 = vmatprep.subr.bf16.mxu0 0
    %1130 = vmatpush1.bf16.xpose.msra.mxu0 0
    %1131 = vmatprep.subr.bf16.mxu0 0
    %1132 = vmatpush1.bf16.xpose.msra.mxu0 0
    %1133 = vmatprep.subr.bf16.mxu0 0
    %1134 = vmatpush1.bf16.xpose.msra.mxu0 0
    %1135 = vmatprep.subr.bf16.mxu0 0
    %1136 = vmatpush1.bf16.xpose.msra.mxu0 0
    %1137 = vmatprep.mubr.bf16.mxu0 0
    %1138 = vmatmul.mubr.bf16.gmra.mrb[0].mxu0 %v1100
    %v1139 = vpop.f32.mrb[0].mxu0
    %v1140 = vadd.f32 %v52, %v1139
    %v1141 = vpop.f32.mrb[0].mxu0
    %v1142 = vpop.f32.mrb[0].mxu0
    %v1143 = vpop.f32.mrb[0].mxu0
    %1144 = vdwg.mxu0
    %v1146 = vsel %vm232, %v1094, 0
    %v1149 = vsel %vm232, %v1096, 0
    %1151 = vmatprep.subr.bf16.mxu0 0
    %1152 = vmatpush1.bf16.xpose.msra.mxu0 %v1149
    %1153 = vmatprep.subr.bf16.mxu0 0
    %1154 = vmatpush1.bf16.xpose.msra.mxu0 0
    %1155 = vmatprep.subr.bf16.mxu0 0
    %1156 = vmatpush1.bf16.xpose.msra.mxu0 0
    %1157 = vmatprep.subr.bf16.mxu0 0
    %1158 = vmatpush1.bf16.xpose.msra.mxu0 0
    %1159 = vmatprep.subr.bf16.mxu0 0
    %1160 = vmatpush1.bf16.xpose.msra.mxu0 0
    %1161 = vmatprep.subr.bf16.mxu0 0
    %1162 = vmatpush1.bf16.xpose.msra.mxu0 0
    %1163 = vmatprep.subr.bf16.mxu0 0
    %1164 = vmatpush1.bf16.xpose.msra.mxu0 0
    %1165 = vmatprep.subr.bf16.mxu0 0
    %1166 = vmatpush1.bf16.xpose.msra.mxu0 0
    %1167 = vmatprep.subr.bf16.mxu0 0
    %1168 = vmatpush1.bf16.xpose.msra.mxu0 0
    %1169 = vmatprep.subr.bf16.mxu0 0
    %1170 = vmatpush1.bf16.xpose.msra.mxu0 0
    %1171 = vmatprep.subr.bf16.mxu0 0
    %1172 = vmatpush1.bf16.xpose.msra.mxu0 0
    %1173 = vmatprep.subr.bf16.mxu0 0
    %1174 = vmatpush1.bf16.xpose.msra.mxu0 0
    %1175 = vmatprep.subr.bf16.mxu0 0
    %1176 = vmatpush1.bf16.xpose.msra.mxu0 0
    %1177 = vmatprep.subr.bf16.mxu0 0
    %1178 = vmatpush1.bf16.xpose.msra.mxu0 0
    %1179 = vmatprep.subr.bf16.mxu0 0
    %1180 = vmatpush1.bf16.xpose.msra.mxu0 0
    %1181 = vmatprep.subr.bf16.mxu0 0
    %1182 = vmatpush1.bf16.xpose.msra.mxu0 0
    %1183 = vmatprep.mubr.bf16.mxu0 0
    %1184 = vmatmul.mubr.bf16.gmra.mrb[0].mxu0 %v1146
    %v1185 = vpop.f32.mrb[0].mxu0
    %v1186 = vadd.f32 %v53, %v1185
    %v1187 = vpop.f32.mrb[0].mxu0
    %v1188 = vpop.f32.mrb[0].mxu0
    %v1189 = vpop.f32.mrb[0].mxu0
    %1190 = vdwg.mxu0
    %v1191 = vsel %vm232, %v1140, -inf
    %1192 = vmax.xlane.f32.xlu0 %v1191
    %v1193 = vpop.xlane.xlu0 %1192
    %v1194 = vsel %vm232, %v1186, -inf
    %1195 = vmax.xlane.f32.xlu0 %v1194
    %v1196 = vpop.xlane.xlu0 %1195
    %v1197 = vsub.f32 %v1140, %v1193
    %v1198 = vsub.f32 %v1186, %v1196
    %v1199 = vmul.f32 %v1197, 1.442695
    %v1200 = vpow.pop %v1199
    %v1201 = vmul.f32 %v1198, 1.442695
    %v1202 = vpow.pop %v1201
    %v1203 = vsel %vm232, %v1200, 0.0
    %1204 = vadd.xlane.f32.xlu0 %v1203
    %v1205 = vpop.xlane.xlu0 %1204
    %v1206 = vsel %vm232, %v1202, 0.0
    %1207 = vadd.xlane.f32.xlu0 %v1206
    %v1208 = vpop.xlane.xlu0 %1207
    %v1209 = vrcp.pop %v1205
    %v1210 = vrcp.pop %v1208
    %v1211 = vmul.f32 %v1200, %v1209
    %v1212 = vmul.f32 %v1202, %v1210
    %v1213 = vpack.c.bf16 %v1211, %v1211
    %v1214 = vpack.c.bf16 %v1212, %v1212
    %v1216 = vsel %vm232, %v1213, 0
    %v1219 = vsel %vm352, %v1097, 0
    %1221 = vmatprep.subr.bf16.mxu0 0
    %1222 = vmatpush1.bf16.msra.mxu0 %v1219
    %1223 = vmatprep.subr.bf16.mxu0 0
    %1224 = vmatpush1.bf16.msra.mxu0 0
    %1225 = vmatprep.subr.bf16.mxu0 0
    %1226 = vmatpush1.bf16.msra.mxu0 0
    %1227 = vmatprep.subr.bf16.mxu0 0
    %1228 = vmatpush1.bf16.msra.mxu0 0
    %1229 = vmatprep.subr.bf16.mxu0 0
    %1230 = vmatpush1.bf16.msra.mxu0 0
    %1231 = vmatprep.subr.bf16.mxu0 0
    %1232 = vmatpush1.bf16.msra.mxu0 0
    %1233 = vmatprep.subr.bf16.mxu0 0
    %1234 = vmatpush1.bf16.msra.mxu0 0
    %1235 = vmatprep.subr.bf16.mxu0 0
    %1236 = vmatpush1.bf16.msra.mxu0 0
    %1237 = vmatprep.subr.bf16.mxu0 0
    %1238 = vmatpush1.bf16.msra.mxu0 0
    %1239 = vmatprep.subr.bf16.mxu0 0
    %1240 = vmatpush1.bf16.msra.mxu0 0
    %1241 = vmatprep.subr.bf16.mxu0 0
    %1242 = vmatpush1.bf16.msra.mxu0 0
    %1243 = vmatprep.subr.bf16.mxu0 0
    %1244 = vmatpush1.bf16.msra.mxu0 0
    %1245 = vmatprep.subr.bf16.mxu0 0
    %1246 = vmatpush1.bf16.msra.mxu0 0
    %1247 = vmatprep.subr.bf16.mxu0 0
    %1248 = vmatpush1.bf16.msra.mxu0 0
    %1249 = vmatprep.subr.bf16.mxu0 0
    %1250 = vmatpush1.bf16.msra.mxu0 0
    %1251 = vmatprep.subr.bf16.mxu0 0
    %1252 = vmatpush1.bf16.msra.mxu0 0
    %1253 = vmatprep.mubr.bf16.mxu0 0
    %1254 = vmatmul.mubr.bf16.gmra.mrb[0].mxu0 %v1216
    %v1255 = vpop.f32.mrb[0].mxu0
    %v1256 = vadd.f32 0.0, %v1255
    %v1257 = vpop.f32.mrb[0].mxu0
    %v1258 = vpop.f32.mrb[0].mxu0
    %v1259 = vpop.f32.mrb[0].mxu0
    %1260 = vdwg.mxu0
    %v1262 = vsel %vm232, %v1214, 0
    %v1265 = vsel %vm352, %v1098, 0
    %1267 = vmatprep.subr.bf16.mxu0 0
    %1268 = vmatpush1.bf16.msra.mxu0 %v1265
    %1269 = vmatprep.subr.bf16.mxu0 0
    %1270 = vmatpush1.bf16.msra.mxu0 0
    %1271 = vmatprep.subr.bf16.mxu0 0
    %1272 = vmatpush1.bf16.msra.mxu0 0
    %1273 = vmatprep.subr.bf16.mxu0 0
    %1274 = vmatpush1.bf16.msra.mxu0 0
    %1275 = vmatprep.subr.bf16.mxu0 0
    %1276 = vmatpush1.bf16.msra.mxu0 0
    %1277 = vmatprep.subr.bf16.mxu0 0
    %1278 = vmatpush1.bf16.msra.mxu0 0
    %1279 = vmatprep.subr.bf16.mxu0 0
    %1280 = vmatpush1.bf16.msra.mxu0 0
    %1281 = vmatprep.subr.bf16.mxu0 0
    %1282 = vmatpush1.bf16.msra.mxu0 0
    %1283 = vmatprep.subr.bf16.mxu0 0
    %1284 = vmatpush1.bf16.msra.mxu0 0
    %1285 = vmatprep.subr.bf16.mxu0 0
    %1286 = vmatpush1.bf16.msra.mxu0 0
    %1287 = vmatprep.subr.bf16.mxu0 0
    %1288 = vmatpush1.bf16.msra.mxu0 0
    %1289 = vmatprep.subr.bf16.mxu0 0
    %1290 = vmatpush1.bf16.msra.mxu0 0
    %1291 = vmatprep.subr.bf16.mxu0 0
    %1292 = vmatpush1.bf16.msra.mxu0 0
    %1293 = vmatprep.subr.bf16.mxu0 0
    %1294 = vmatpush1.bf16.msra.mxu0 0
    %1295 = vmatprep.subr.bf16.mxu0 0
    %1296 = vmatpush1.bf16.msra.mxu0 0
    %1297 = vmatprep.subr.bf16.mxu0 0
    %1298 = vmatpush1.bf16.msra.mxu0 0
    %1299 = vmatprep.mubr.bf16.mxu0 0
    %1300 = vmatmul.mubr.bf16.gmra.mrb[0].mxu0 %v1262
    %v1301 = vpop.f32.mrb[0].mxu0
    %v1302 = vadd.f32 0.0, %v1301
    %v1303 = vpop.f32.mrb[0].mxu0
    %v1304 = vpop.f32.mrb[0].mxu0
    %v1305 = vpop.f32.mrb[0].mxu0
    %1306 = vdwg.mxu0
    %v1307 = vpack.c.bf16 %v1302, %v1256
    %s1308 = scalar_lea.vmem %s10, 16
    %v1309 = vld [vmem:[%s1308] sm:$0xff]
    %v1310 = vpack.c.bf16 %v1309, %v1309
    %v1312 = vsel %vm232, %v1307, 0
    %v1315 = vsel %vm352, %v1310, 0
    %1317 = vmatprep.subr.bf16.mxu0 0
    %1318 = vmatpush1.bf16.msra.mxu0 %v1315
    %1319 = vmatprep.subr.bf16.mxu0 0
    %1320 = vmatpush1.bf16.msra.mxu0 0
    %1321 = vmatprep.subr.bf16.mxu0 0
    %1322 = vmatpush1.bf16.msra.mxu0 0
    %1323 = vmatprep.subr.bf16.mxu0 0
    %1324 = vmatpush1.bf16.msra.mxu0 0
    %1325 = vmatprep.subr.bf16.mxu0 0
    %1326 = vmatpush1.bf16.msra.mxu0 0
    %1327 = vmatprep.subr.bf16.mxu0 0
    %1328 = vmatpush1.bf16.msra.mxu0 0
    %1329 = vmatprep.subr.bf16.mxu0 0
    %1330 = vmatpush1.bf16.msra.mxu0 0
    %1331 = vmatprep.subr.bf16.mxu0 0
    %1332 = vmatpush1.bf16.msra.mxu0 0
    %1333 = vmatprep.subr.bf16.mxu0 0
    %1334 = vmatpush1.bf16.msra.mxu0 0
    %1335 = vmatprep.subr.bf16.mxu0 0
    %1336 = vmatpush1.bf16.msra.mxu0 0
    %1337 = vmatprep.subr.bf16.mxu0 0
    %1338 = vmatpush1.bf16.msra.mxu0 0
    %1339 = vmatprep.subr.bf16.mxu0 0
    %1340 = vmatpush1.bf16.msra.mxu0 0
    %1341 = vmatprep.subr.bf16.mxu0 0
    %1342 = vmatpush1.bf16.msra.mxu0 0
    %1343 = vmatprep.subr.bf16.mxu0 0
    %1344 = vmatpush1.bf16.msra.mxu0 0
    %1345 = vmatprep.subr.bf16.mxu0 0
    %1346 = vmatpush1.bf16.msra.mxu0 0
    %1347 = vmatprep.subr.bf16.mxu0 0
    %1348 = vmatpush1.bf16.msra.mxu0 0
    %1349 = vmatprep.mubr.bf16.mxu0 0
    %1350 = vmatmul.mubr.bf16.gmra.mrb[0].mxu0 %v1312
    %v1351 = vpop.f32.mrb[0].mxu0
    %v1352 = vadd.f32 0.0, %v1351
    %v1353 = vpop.f32.mrb[0].mxu0
    %v1354 = vpop.f32.mrb[0].mxu0
    %v1355 = vadd.f32 0.0, %v1354
    %v1356 = vpop.f32.mrb[0].mxu0
    %1357 = vdwg.mxu0
    %v1358 = vadd.f32 %v919, %v1352
    %v1359 = vadd.f32 %v922, %v1355
    %s1360 = scalar_lea.vmem %s4, 96
    %v1361 = vld [vmem:[%s1360] sm:$0xff]
    %v1362 = vld [vmem:[%s1360 + $0x8] sm:$0xff]
    %v1363 = vld [vmem:[%s1360 + $0x10] sm:$0xff]
    %v1364 = vld [vmem:[%s1360 + $0x18] sm:$0xff]
    %v1365 = vpack.c.bf16 %v1362, %v1361
    %v1366 = vpack.c.bf16 %v1364, %v1363
    %s1367 = scalar_lea.vmem %s5, 3
    %v1368 = vld [vmem:[%s1367] sm:$0x1]
    %v1370 = vlaneseq
    %v1371 = vshrl.u32 %v1370, 7
    %v1372 = vsub.s32 0, %v1371
    %v1373 = vrot.slane %v1368, %v1372
    %1375 = vmatprep.subr.bf16.mxu0 0
    %1376 = vmatpush1.bf16.msra.mxu0 %v1365
    %1377 = vmatprep.subr.bf16.mxu0 0
    %1378 = vmatpush1.bf16.msra.mxu0 %v1366
    %1379 = vmatprep.subr.bf16.mxu0 0
    %1380 = vmatpush1.bf16.msra.mxu0 0
    %1381 = vmatprep.subr.bf16.mxu0 0
    %1382 = vmatpush1.bf16.msra.mxu0 0
    %1383 = vmatprep.subr.bf16.mxu0 0
    %1384 = vmatpush1.bf16.msra.mxu0 0
    %1385 = vmatprep.subr.bf16.mxu0 0
    %1386 = vmatpush1.bf16.msra.mxu0 0
    %1387 = vmatprep.subr.bf16.mxu0 0
    %1388 = vmatpush1.bf16.msra.mxu0 0
    %1389 = vmatprep.subr.bf16.mxu0 0
    %1390 = vmatpush1.bf16.msra.mxu0 0
    %1391 = vmatprep.subr.bf16.mxu0 0
    %1392 = vmatpush1.bf16.msra.mxu0 0
    %1393 = vmatprep.subr.bf16.mxu0 0
    %1394 = vmatpush1.bf16.msra.mxu0 0
    %1395 = vmatprep.subr.bf16.mxu0 0
    %1396 = vmatpush1.bf16.msra.mxu0 0
    %1397 = vmatprep.subr.bf16.mxu0 0
    %1398 = vmatpush1.bf16.msra.mxu0 0
    %1399 = vmatprep.subr.bf16.mxu0 0
    %1400 = vmatpush1.bf16.msra.mxu0 0
    %1401 = vmatprep.subr.bf16.mxu0 0
    %1402 = vmatpush1.bf16.msra.mxu0 0
    %1403 = vmatprep.subr.bf16.mxu0 0
    %1404 = vmatpush1.bf16.msra.mxu0 0
    %1405 = vmatprep.subr.bf16.mxu0 0
    %1406 = vmatpush1.bf16.msra.mxu0 0
    %1407 = vmatprep.mubr.bf16.mxu0 0
    %1408 = vmatmul.mubr.bf16.gmra.mrb[0].mxu0 %v69
    %v1409 = vpop.f32.mrb[0].mxu0
    %v1410 = vadd.f32 %v1373, %v1409
    %v1411 = vpop.f32.mrb[0].mxu0
    %v1412 = vpop.f32.mrb[0].mxu0
    %v1413 = vadd.f32 %v1373, %v1412
    %v1414 = vpop.f32.mrb[0].mxu0
    %1415 = vdwg.mxu0
    %s1416 = scalar_lea.vmem %s6, 96
    %v1417 = vld [vmem:[%s1416] sm:$0xff]
    %v1418 = vld [vmem:[%s1416 + $0x8] sm:$0xff]
    %v1419 = vld [vmem:[%s1416 + $0x10] sm:$0xff]
    %v1420 = vld [vmem:[%s1416 + $0x18] sm:$0xff]
    %v1421 = vpack.c.bf16 %v1418, %v1417
    %v1422 = vpack.c.bf16 %v1420, %v1419
    %s1423 = scalar_lea.vmem %s7, 3
    %v1424 = vld [vmem:[%s1423] sm:$0x1]
    %v1426 = vlaneseq
    %v1427 = vshrl.u32 %v1426, 7
    %v1428 = vsub.s32 0, %v1427
    %v1429 = vrot.slane %v1424, %v1428
    %1431 = vmatprep.subr.bf16.mxu0 0
    %1432 = vmatpush1.bf16.msra.mxu0 %v1421
    %1433 = vmatprep.subr.bf16.mxu0 0
    %1434 = vmatpush1.bf16.msra.mxu0 %v1422
    %1435 = vmatprep.subr.bf16.mxu0 0
    %1436 = vmatpush1.bf16.msra.mxu0 0
    %1437 = vmatprep.subr.bf16.mxu0 0
    %1438 = vmatpush1.bf16.msra.mxu0 0
    %1439 = vmatprep.subr.bf16.mxu0 0
    %1440 = vmatpush1.bf16.msra.mxu0 0
    %1441 = vmatprep.subr.bf16.mxu0 0
    %1442 = vmatpush1.bf16.msra.mxu0 0
    %1443 = vmatprep.subr.bf16.mxu0 0
    %1444 = vmatpush1.bf16.msra.mxu0 0
    %1445 = vmatprep.subr.bf16.mxu0 0
    %1446 = vmatpush1.bf16.msra.mxu0 0
    %1447 = vmatprep.subr.bf16.mxu0 0
    %1448 = vmatpush1.bf16.msra.mxu0 0
    %1449 = vmatprep.subr.bf16.mxu0 0
    %1450 = vmatpush1.bf16.msra.mxu0 0
    %1451 = vmatprep.subr.bf16.mxu0 0
    %1452 = vmatpush1.bf16.msra.mxu0 0
    %1453 = vmatprep.subr.bf16.mxu0 0
    %1454 = vmatpush1.bf16.msra.mxu0 0
    %1455 = vmatprep.subr.bf16.mxu0 0
    %1456 = vmatpush1.bf16.msra.mxu0 0
    %1457 = vmatprep.subr.bf16.mxu0 0
    %1458 = vmatpush1.bf16.msra.mxu0 0
    %1459 = vmatprep.subr.bf16.mxu0 0
    %1460 = vmatpush1.bf16.msra.mxu0 0
    %1461 = vmatprep.subr.bf16.mxu0 0
    %1462 = vmatpush1.bf16.msra.mxu0 0
    %1463 = vmatprep.mubr.bf16.mxu0 0
    %1464 = vmatmul.mubr.bf16.gmra.mrb[0].mxu0 %v126
    %v1465 = vpop.f32.mrb[0].mxu0
    %v1466 = vadd.f32 %v1429, %v1465
    %v1467 = vpop.f32.mrb[0].mxu0
    %v1468 = vpop.f32.mrb[0].mxu0
    %v1469 = vadd.f32 %v1429, %v1468
    %v1470 = vpop.f32.mrb[0].mxu0
    %1471 = vdwg.mxu0
    %s1472 = scalar_lea.vmem %s8, 96
    %v1473 = vld [vmem:[%s1472] sm:$0xff]
    %v1474 = vld [vmem:[%s1472 + $0x8] sm:$0xff]
    %v1475 = vld [vmem:[%s1472 + $0x10] sm:$0xff]
    %v1476 = vld [vmem:[%s1472 + $0x18] sm:$0xff]
    %v1477 = vpack.c.bf16 %v1474, %v1473
    %v1478 = vpack.c.bf16 %v1476, %v1475
    %s1479 = scalar_lea.vmem %s9, 3
    %v1480 = vld [vmem:[%s1479] sm:$0x1]
    %v1482 = vlaneseq
    %v1483 = vshrl.u32 %v1482, 7
    %v1484 = vsub.s32 0, %v1483
    %v1485 = vrot.slane %v1480, %v1484
    %1487 = vmatprep.subr.bf16.mxu0 0
    %1488 = vmatpush1.bf16.msra.mxu0 %v1477
    %1489 = vmatprep.subr.bf16.mxu0 0
    %1490 = vmatpush1.bf16.msra.mxu0 %v1478
    %1491 = vmatprep.subr.bf16.mxu0 0
    %1492 = vmatpush1.bf16.msra.mxu0 0
    %1493 = vmatprep.subr.bf16.mxu0 0
    %1494 = vmatpush1.bf16.msra.mxu0 0
    %1495 = vmatprep.subr.bf16.mxu0 0
    %1496 = vmatpush1.bf16.msra.mxu0 0
    %1497 = vmatprep.subr.bf16.mxu0 0
    %1498 = vmatpush1.bf16.msra.mxu0 0
    %1499 = vmatprep.subr.bf16.mxu0 0
    %1500 = vmatpush1.bf16.msra.mxu0 0
    %1501 = vmatprep.subr.bf16.mxu0 0
    %1502 = vmatpush1.bf16.msra.mxu0 0
    %1503 = vmatprep.subr.bf16.mxu0 0
    %1504 = vmatpush1.bf16.msra.mxu0 0
    %1505 = vmatprep.subr.bf16.mxu0 0
    %1506 = vmatpush1.bf16.msra.mxu0 0
    %1507 = vmatprep.subr.bf16.mxu0 0
    %1508 = vmatpush1.bf16.msra.mxu0 0
    %1509 = vmatprep.subr.bf16.mxu0 0
    %1510 = vmatpush1.bf16.msra.mxu0 0
    %1511 = vmatprep.subr.bf16.mxu0 0
    %1512 = vmatpush1.bf16.msra.mxu0 0
    %1513 = vmatprep.subr.bf16.mxu0 0
    %1514 = vmatpush1.bf16.msra.mxu0 0
    %1515 = vmatprep.subr.bf16.mxu0 0
    %1516 = vmatpush1.bf16.msra.mxu0 0
    %1517 = vmatprep.subr.bf16.mxu0 0
    %1518 = vmatpush1.bf16.msra.mxu0 0
    %1519 = vmatprep.mubr.bf16.mxu0 0
    %1520 = vmatmul.mubr.bf16.gmra.mrb[0].mxu0 %v183
    %v1521 = vpop.f32.mrb[0].mxu0
    %v1522 = vadd.f32 %v1485, %v1521
    %v1523 = vpop.f32.mrb[0].mxu0
    %v1524 = vpop.f32.mrb[0].mxu0
    %v1525 = vadd.f32 %v1485, %v1524
    %v1526 = vpop.f32.mrb[0].mxu0
    %1527 = vdwg.mxu0
    %v1528 = vpack.c.bf16 %v1410, %v1410
    %v1529 = vpack.c.bf16 %v1413, %v1413
    %v1530 = vpack.c.bf16 %v1466, %v1466
    %v1531 = vpack.c.bf16 %v1469, %v1469
    %v1532 = vpack.c.bf16 %v1522, %v1522
    %v1533 = vpack.c.bf16 %v1525, %v1525
    %v1535 = vsel %vm232, %v1528, 0
    %v1538 = vsel %vm232, %v1530, 0
    %1540 = vmatprep.subr.bf16.mxu0 0
    %1541 = vmatpush1.bf16.xpose.msra.mxu0 %v1538
    %1542 = vmatprep.subr.bf16.mxu0 0
    %1543 = vmatpush1.bf16.xpose.msra.mxu0 0
    %1544 = vmatprep.subr.bf16.mxu0 0
    %1545 = vmatpush1.bf16.xpose.msra.mxu0 0
    %1546 = vmatprep.subr.bf16.mxu0 0
    %1547 = vmatpush1.bf16.xpose.msra.mxu0 0
    %1548 = vmatprep.subr.bf16.mxu0 0
    %1549 = vmatpush1.bf16.xpose.msra.mxu0 0
    %1550 = vmatprep.subr.bf16.mxu0 0
    %1551 = vmatpush1.bf16.xpose.msra.mxu0 0
    %1552 = vmatprep.subr.bf16.mxu0 0
    %1553 = vmatpush1.bf16.xpose.msra.mxu0 0
    %1554 = vmatprep.subr.bf16.mxu0 0
    %1555 = vmatpush1.bf16.xpose.msra.mxu0 0
    %1556 = vmatprep.subr.bf16.mxu0 0
    %1557 = vmatpush1.bf16.xpose.msra.mxu0 0
    %1558 = vmatprep.subr.bf16.mxu0 0
    %1559 = vmatpush1.bf16.xpose.msra.mxu0 0
    %1560 = vmatprep.subr.bf16.mxu0 0
    %1561 = vmatpush1.bf16.xpose.msra.mxu0 0
    %1562 = vmatprep.subr.bf16.mxu0 0
    %1563 = vmatpush1.bf16.xpose.msra.mxu0 0
    %1564 = vmatprep.subr.bf16.mxu0 0
    %1565 = vmatpush1.bf16.xpose.msra.mxu0 0
    %1566 = vmatprep.subr.bf16.mxu0 0
    %1567 = vmatpush1.bf16.xpose.msra.mxu0 0
    %1568 = vmatprep.subr.bf16.mxu0 0
    %1569 = vmatpush1.bf16.xpose.msra.mxu0 0
    %1570 = vmatprep.subr.bf16.mxu0 0
    %1571 = vmatpush1.bf16.xpose.msra.mxu0 0
    %1572 = vmatprep.mubr.bf16.mxu0 0
    %1573 = vmatmul.mubr.bf16.gmra.mrb[0].mxu0 %v1535
    %v1574 = vpop.f32.mrb[0].mxu0
    %v1575 = vadd.f32 %v52, %v1574
    %v1576 = vpop.f32.mrb[0].mxu0
    %v1577 = vpop.f32.mrb[0].mxu0
    %v1578 = vpop.f32.mrb[0].mxu0
    %1579 = vdwg.mxu0
    %v1581 = vsel %vm232, %v1529, 0
    %v1584 = vsel %vm232, %v1531, 0
    %1586 = vmatprep.subr.bf16.mxu0 0
    %1587 = vmatpush1.bf16.xpose.msra.mxu0 %v1584
    %1588 = vmatprep.subr.bf16.mxu0 0
    %1589 = vmatpush1.bf16.xpose.msra.mxu0 0
    %1590 = vmatprep.subr.bf16.mxu0 0
    %1591 = vmatpush1.bf16.xpose.msra.mxu0 0
    %1592 = vmatprep.subr.bf16.mxu0 0
    %1593 = vmatpush1.bf16.xpose.msra.mxu0 0
    %1594 = vmatprep.subr.bf16.mxu0 0
    %1595 = vmatpush1.bf16.xpose.msra.mxu0 0
    %1596 = vmatprep.subr.bf16.mxu0 0
    %1597 = vmatpush1.bf16.xpose.msra.mxu0 0
    %1598 = vmatprep.subr.bf16.mxu0 0
    %1599 = vmatpush1.bf16.xpose.msra.mxu0 0
    %1600 = vmatprep.subr.bf16.mxu0 0
    %1601 = vmatpush1.bf16.xpose.msra.mxu0 0
    %1602 = vmatprep.subr.bf16.mxu0 0
    %1603 = vmatpush1.bf16.xpose.msra.mxu0 0
    %1604 = vmatprep.subr.bf16.mxu0 0
    %1605 = vmatpush1.bf16.xpose.msra.mxu0 0
    %1606 = vmatprep.subr.bf16.mxu0 0
    %1607 = vmatpush1.bf16.xpose.msra.mxu0 0
    %1608 = vmatprep.subr.bf16.mxu0 0
    %1609 = vmatpush1.bf16.xpose.msra.mxu0 0
    %1610 = vmatprep.subr.bf16.mxu0 0
    %1611 = vmatpush1.bf16.xpose.msra.mxu0 0
    %1612 = vmatprep.subr.bf16.mxu0 0
    %1613 = vmatpush1.bf16.xpose.msra.mxu0 0
    %1614 = vmatprep.subr.bf16.mxu0 0
    %1615 = vmatpush1.bf16.xpose.msra.mxu0 0
    %1616 = vmatprep.subr.bf16.mxu0 0
    %1617 = vmatpush1.bf16.xpose.msra.mxu0 0
    %1618 = vmatprep.mubr.bf16.mxu0 0
    %1619 = vmatmul.mubr.bf16.gmra.mrb[0].mxu0 %v1581
    %v1620 = vpop.f32.mrb[0].mxu0
    %v1621 = vadd.f32 %v53, %v1620
    %v1622 = vpop.f32.mrb[0].mxu0
    %v1623 = vpop.f32.mrb[0].mxu0
    %v1624 = vpop.f32.mrb[0].mxu0
    %1625 = vdwg.mxu0
    %v1626 = vsel %vm232, %v1575, -inf
    %1627 = vmax.xlane.f32.xlu0 %v1626
    %v1628 = vpop.xlane.xlu0 %1627
    %v1629 = vsel %vm232, %v1621, -inf
    %1630 = vmax.xlane.f32.xlu0 %v1629
    %v1631 = vpop.xlane.xlu0 %1630
    %v1632 = vsub.f32 %v1575, %v1628
    %v1633 = vsub.f32 %v1621, %v1631
    %v1634 = vmul.f32 %v1632, 1.442695
    %v1635 = vpow.pop %v1634
    %v1636 = vmul.f32 %v1633, 1.442695
    %v1637 = vpow.pop %v1636
    %v1638 = vsel %vm232, %v1635, 0.0
    %1639 = vadd.xlane.f32.xlu0 %v1638
    %v1640 = vpop.xlane.xlu0 %1639
    %v1641 = vsel %vm232, %v1637, 0.0
    %1642 = vadd.xlane.f32.xlu0 %v1641
    %v1643 = vpop.xlane.xlu0 %1642
    %v1644 = vrcp.pop %v1640
    %v1645 = vrcp.pop %v1643
    %v1646 = vmul.f32 %v1635, %v1644
    %v1647 = vmul.f32 %v1637, %v1645
    %v1648 = vpack.c.bf16 %v1646, %v1646
    %v1649 = vpack.c.bf16 %v1647, %v1647
    %v1651 = vsel %vm232, %v1648, 0
    %v1654 = vsel %vm352, %v1532, 0
    %1656 = vmatprep.subr.bf16.mxu0 0
    %1657 = vmatpush1.bf16.msra.mxu0 %v1654
    %1658 = vmatprep.subr.bf16.mxu0 0
    %1659 = vmatpush1.bf16.msra.mxu0 0
    %1660 = vmatprep.subr.bf16.mxu0 0
    %1661 = vmatpush1.bf16.msra.mxu0 0
    %1662 = vmatprep.subr.bf16.mxu0 0
    %1663 = vmatpush1.bf16.msra.mxu0 0
    %1664 = vmatprep.subr.bf16.mxu0 0
    %1665 = vmatpush1.bf16.msra.mxu0 0
    %1666 = vmatprep.subr.bf16.mxu0 0
    %1667 = vmatpush1.bf16.msra.mxu0 0
    %1668 = vmatprep.subr.bf16.mxu0 0
    %1669 = vmatpush1.bf16.msra.mxu0 0
    %1670 = vmatprep.subr.bf16.mxu0 0
    %1671 = vmatpush1.bf16.msra.mxu0 0
    %1672 = vmatprep.subr.bf16.mxu0 0
    %1673 = vmatpush1.bf16.msra.mxu0 0
    %1674 = vmatprep.subr.bf16.mxu0 0
    %1675 = vmatpush1.bf16.msra.mxu0 0
    %1676 = vmatprep.subr.bf16.mxu0 0
    %1677 = vmatpush1.bf16.msra.mxu0 0
    %1678 = vmatprep.subr.bf16.mxu0 0
    %1679 = vmatpush1.bf16.msra.mxu0 0
    %1680 = vmatprep.subr.bf16.mxu0 0
    %1681 = vmatpush1.bf16.msra.mxu0 0
    %1682 = vmatprep.subr.bf16.mxu0 0
    %1683 = vmatpush1.bf16.msra.mxu0 0
    %1684 = vmatprep.subr.bf16.mxu0 0
    %1685 = vmatpush1.bf16.msra.mxu0 0
    %1686 = vmatprep.subr.bf16.mxu0 0
    %1687 = vmatpush1.bf16.msra.mxu0 0
    %1688 = vmatprep.mubr.bf16.mxu0 0
    %1689 = vmatmul.mubr.bf16.gmra.mrb[0].mxu0 %v1651
    %v1690 = vpop.f32.mrb[0].mxu0
    %v1691 = vadd.f32 0.0, %v1690
    %v1692 = vpop.f32.mrb[0].mxu0
    %v1693 = vpop.f32.mrb[0].mxu0
    %v1694 = vpop.f32.mrb[0].mxu0
    %1695 = vdwg.mxu0
    %v1697 = vsel %vm232, %v1649, 0
    %v1700 = vsel %vm352, %v1533, 0
    %1702 = vmatprep.subr.bf16.mxu0 0
    %1703 = vmatpush1.bf16.msra.mxu0 %v1700
    %1704 = vmatprep.subr.bf16.mxu0 0
    %1705 = vmatpush1.bf16.msra.mxu0 0
    %1706 = vmatprep.subr.bf16.mxu0 0
    %1707 = vmatpush1.bf16.msra.mxu0 0
    %1708 = vmatprep.subr.bf16.mxu0 0
    %1709 = vmatpush1.bf16.msra.mxu0 0
    %1710 = vmatprep.subr.bf16.mxu0 0
    %1711 = vmatpush1.bf16.msra.mxu0 0
    %1712 = vmatprep.subr.bf16.mxu0 0
    %1713 = vmatpush1.bf16.msra.mxu0 0
    %1714 = vmatprep.subr.bf16.mxu0 0
    %1715 = vmatpush1.bf16.msra.mxu0 0
    %1716 = vmatprep.subr.bf16.mxu0 0
    %1717 = vmatpush1.bf16.msra.mxu0 0
    %1718 = vmatprep.subr.bf16.mxu0 0
    %1719 = vmatpush1.bf16.msra.mxu0 0
    %1720 = vmatprep.subr.bf16.mxu0 0
    %1721 = vmatpush1.bf16.msra.mxu0 0
    %1722 = vmatprep.subr.bf16.mxu0 0
    %1723 = vmatpush1.bf16.msra.mxu0 0
    %1724 = vmatprep.subr.bf16.mxu0 0
    %1725 = vmatpush1.bf16.msra.mxu0 0
    %1726 = vmatprep.subr.bf16.mxu0 0
    %1727 = vmatpush1.bf16.msra.mxu0 0
    %1728 = vmatprep.subr.bf16.mxu0 0
    %1729 = vmatpush1.bf16.msra.mxu0 0
    %1730 = vmatprep.subr.bf16.mxu0 0
    %1731 = vmatpush1.bf16.msra.mxu0 0
    %1732 = vmatprep.subr.bf16.mxu0 0
    %1733 = vmatpush1.bf16.msra.mxu0 0
    %1734 = vmatprep.mubr.bf16.mxu0 0
    %1735 = vmatmul.mubr.bf16.gmra.mrb[0].mxu0 %v1697
    %v1736 = vpop.f32.mrb[0].mxu0
    %v1737 = vadd.f32 0.0, %v1736
    %v1738 = vpop.f32.mrb[0].mxu0
    %v1739 = vpop.f32.mrb[0].mxu0
    %v1740 = vpop.f32.mrb[0].mxu0
    %1741 = vdwg.mxu0
    %v1742 = vpack.c.bf16 %v1737, %v1691
    %s1743 = scalar_lea.vmem %s10, 24
    %v1744 = vld [vmem:[%s1743] sm:$0xff]
    %v1745 = vpack.c.bf16 %v1744, %v1744
    %v1747 = vsel %vm232, %v1742, 0
    %v1750 = vsel %vm352, %v1745, 0
    %1752 = vmatprep.subr.bf16.mxu0 0
    %1753 = vmatpush1.bf16.msra.mxu0 %v1750
    %1754 = vmatprep.subr.bf16.mxu0 0
    %1755 = vmatpush1.bf16.msra.mxu0 0
    %1756 = vmatprep.subr.bf16.mxu0 0
    %1757 = vmatpush1.bf16.msra.mxu0 0
    %1758 = vmatprep.subr.bf16.mxu0 0
    %1759 = vmatpush1.bf16.msra.mxu0 0
    %1760 = vmatprep.subr.bf16.mxu0 0
    %1761 = vmatpush1.bf16.msra.mxu0 0
    %1762 = vmatprep.subr.bf16.mxu0 0
    %1763 = vmatpush1.bf16.msra.mxu0 0
    %1764 = vmatprep.subr.bf16.mxu0 0
    %1765 = vmatpush1.bf16.msra.mxu0 0
    %1766 = vmatprep.subr.bf16.mxu0 0
    %1767 = vmatpush1.bf16.msra.mxu0 0
    %1768 = vmatprep.subr.bf16.mxu0 0
    %1769 = vmatpush1.bf16.msra.mxu0 0
    %1770 = vmatprep.subr.bf16.mxu0 0
    %1771 = vmatpush1.bf16.msra.mxu0 0
    %1772 = vmatprep.subr.bf16.mxu0 0
    %1773 = vmatpush1.bf16.msra.mxu0 0
    %1774 = vmatprep.subr.bf16.mxu0 0
    %1775 = vmatpush1.bf16.msra.mxu0 0
    %1776 = vmatprep.subr.bf16.mxu0 0
    %1777 = vmatpush1.bf16.msra.mxu0 0
    %1778 = vmatprep.subr.bf16.mxu0 0
    %1779 = vmatpush1.bf16.msra.mxu0 0
    %1780 = vmatprep.subr.bf16.mxu0 0
    %1781 = vmatpush1.bf16.msra.mxu0 0
    %1782 = vmatprep.subr.bf16.mxu0 0
    %1783 = vmatpush1.bf16.msra.mxu0 0
    %1784 = vmatprep.mubr.bf16.mxu0 0
    %1785 = vmatmul.mubr.bf16.gmra.mrb[0].mxu0 %v1747
    %v1786 = vpop.f32.mrb[0].mxu0
    %v1787 = vadd.f32 0.0, %v1786
    %v1788 = vpop.f32.mrb[0].mxu0
    %v1789 = vpop.f32.mrb[0].mxu0
    %v1790 = vadd.f32 0.0, %v1789
    %v1791 = vpop.f32.mrb[0].mxu0
    %1792 = vdwg.mxu0
    %v1793 = vadd.f32 %v1358, %v1787
    %v1794 = vadd.f32 %v1359, %v1790
    %v1795 = vld [vmem:[%s11] sm:$0x1]
    %v1797 = vlaneseq
    %v1798 = vshrl.u32 %v1797, 7
    %v1799 = vsub.s32 0, %v1798
    %v1800 = vrot.slane %v1795, %v1799
    %v1802 = vadd.f32 %v1793, %v1800
    %v1803 = vadd.f32 %v1794, %v1800
    %1804 = vst.msk [vmem:[#allocation2] sm:$0xff] %vm67, %v1802
    %1805 = vst.msk [vmem:[#allocation2 + $0x8] sm:$0xff] %vm67, %v1803
    // Predicated region
    $region50: #{tpu_custom_call.1} parent=1 // pred_check
      _
    $region51: #{tpu_custom_call.1} parent=1 // pred_check_branch
      %1807 = sbr.rel (0) target = $region53
    $region52: #{tpu_custom_call.1} parent=1 // pred_region
      %s1809 = ssub.s32 256, 256
      %1810 = vsyncadd [#allocation3], %s1809
      %s1811 = sshll.u32 [#allocation2], 4
      %s1812 = int_to_ptr.vmem [resolvable:$true] %s1811
      %1817 = dma.vmem_to_hbm [thread:$0]  %s1812, 256, %s12, [#allocation3], 128, 128, 8
    $region53: #{tpu_custom_call.1} parent=1 // pred_fallthru
      _
    // Predicated region
    $region54: #{tpu_custom_call.1} parent=1 // pred_check
      _
    $region55: #{tpu_custom_call.1} parent=1 // pred_check_branch
      %1819 = sbr.rel (0) target = $region57
    $region56: #{tpu_custom_call.1} parent=1 // pred_region
      %1820 = dma.done [#allocation3], 256
    $region57: #{tpu_custom_call.1} parent=1 // pred_fallthru
      _
    %1821 = vsyncpa [#allocation3], 1

</llo_original>
